<compile_context>
chip_gen: v7x
topology: tpu7x:2x2x1
jax: 0.10.0
libtpu: 0.0.40
codegen_flags: <defaults>
</compile_context>

<pallas_src>
import jax
import jax.numpy as jnp
from jax.experimental import pallas as pl
from jax.experimental.pallas import tpu as pltpu


def _round_up(n, m):
    return ((n + m - 1) // m) * m


def _discriminator_kernel(x_ref, a_ref, w1x_ref, w1a_ref, b1_ref, w3_ref,
                          b3_ref, out_ref):
    """One batch tile of sigmoid(tanh([x, a] @ W1^T + b1) @ W3^T + b3).

    The concat is fused away by splitting W1 into its x-rows / a-rows, and the
    (H -> 1) output layer is an NT matmul (1,H) x (TB,H)^T so the result lands
    lane-dense as a (1, TB) row.
    """
    # First layer on the MXU, f32 accumulation.  (TB, H)
    h = jnp.dot(x_ref[...], w1x_ref[...], preferred_element_type=jnp.float32)
    h = h + jnp.dot(a_ref[...], w1a_ref[...],
                    preferred_element_type=jnp.float32)
    h = jnp.tanh(h + b1_ref[...])

    # Second layer: contract H of w3 (1, H) against H of h (TB, H) -> (1, TB).
    logit = jax.lax.dot_general(
        w3_ref[...], h,
        dimension_numbers=(((1,), (1,)), ((), ())),
        preferred_element_type=jnp.float32)
    out_ref[...] = jax.nn.sigmoid(logit + b3_ref[0, 0]).astype(out_ref.dtype)


def discriminator_forward(x, a, params, *, tile_b=512):
    """x: (B, state_dim), a: (B, action_dim) -> (B, 1) probabilities."""
    B, S = x.shape
    A = a.shape[1]
    w1x = params["w1x"]          # (S, H)  rows 0:S of fc1.weight^T
    w1a = params["w1a"]          # (A, H)  rows S:  of fc1.weight^T
    b1 = params["b1"]            # (1, H)
    w3 = params["w3"]            # (1, H)  fc3.weight row (no transpose needed)
    b3 = params["b3"]            # (1, 1)  scalar bias (kept in SMEM)
    H = w1x.shape[1]

    # Batch tile: multiple of 128 so the (1, TB) output rows are lane-dense.
    TB = _round_up(min(tile_b, _round_up(B, 128)), 128)
    G = pl.cdiv(B, TB)
    B_pad = G * TB
    if B_pad != B:
        # NB: pick B as a multiple of tile_b in training loops to skip this pad.
        x = jnp.pad(x, ((0, B_pad - B), (0, 0)))
        a = jnp.pad(a, ((0, B_pad - B), (0, 0)))

    out_row = pl.pallas_call(
        _discriminator_kernel,
        out_shape=jax.ShapeDtypeStruct((1, B_pad), jnp.float32),
        grid=(G,),
        in_specs=[
            # Batch-streamed activations: pipelined/double-buffered by Pallas.
            pl.BlockSpec((TB, S), lambda i: (i, 0)),
            pl.BlockSpec((TB, A), lambda i: (i, 0)),
            # Parameters: constant index_map -> resident in VMEM across tiles.
            pl.BlockSpec((S, H), lambda i: (0, 0)),
            pl.BlockSpec((A, H), lambda i: (0, 0)),
            pl.BlockSpec((1, H), lambda i: (0, 0)),
            pl.BlockSpec((1, H), lambda i: (0, 0)),
            # b3 is a true scalar: SMEM instead of a padded (8,128) VMEM tile.
            pl.BlockSpec(memory_space=pltpu.MemorySpace.SMEM),
        ],
        out_specs=pl.BlockSpec((1, TB), lambda i: (0, i)),
        compiler_params=pltpu.CompilerParams(
            # Independent batch tiles -> sharded across TCs on v7x megacore.
            dimension_semantics=("parallel",),
        ),
    )(x, a, w1x, w1a, b1, w3, b3)

    return out_row[0, :B].reshape(B, 1)


def init_discriminator_params(key, state_dim, hidden_dim, action_dim):
    """Mirrors the PyTorch module: Linear weights ~ Normal(0, 0.1) (.normal_),
    biases keep the torch.nn.Linear default U(-1/sqrt(fan_in), +1/sqrt(fan_in)).

    Weights are stored pre-transposed / pre-split for the kernel:
      w1x = fc1.weight[:, :state_dim].T  (S, H)
      w1a = fc1.weight[:, state_dim:].T  (A, H)   (matches th.cat([x, a], 1))
      w3  = fc3.weight                   (1, H)
    """
    k1, k2, k3, k4 = jax.random.split(key, 4)
    in1 = state_dim + action_dim
    bound1 = 1.0 / (in1 ** 0.5)
    bound3 = 1.0 / (hidden_dim ** 0.5)
    fc1_w = 0.1 * jax.random.normal(k1, (hidden_dim, in1), jnp.float32)
    fc1_b = jax.random.uniform(k2, (hidden_dim,), jnp.float32, -bound1, bound1)
    fc3_w = 0.1 * jax.random.normal(k3, (1, hidden_dim), jnp.float32)
    fc3_b = jax.random.uniform(k4, (1,), jnp.float32, -bound3, bound3)
    return {
        "w1x": jnp.asarray(fc1_w[:, :state_dim].T),   # (S, H)
        "w1a": jnp.asarray(fc1_w[:, state_dim:].T),   # (A, H)
        "b1": fc1_b.reshape(1, hidden_dim),           # (1, H)
        "w3": fc3_w,                                  # (1, H)
        "b3": fc3_b.reshape(1, 1),                    # (1, 1)
    }


def _reference_forward(x, a, params):
    """Pure-JAX reference matching the PyTorch forward semantics."""
    w1 = jnp.concatenate([params["w1x"], params["w1a"]], axis=0)   # (S+A, H)
    cat = jnp.concatenate([x, a], axis=1)
    h = jnp.tanh(cat @ w1 + params["b1"])
    return jax.nn.sigmoid(h @ params["w3"].T + params["b3"])


if __name__ == "__main__":
    # Small shapes consistent with the module's forward.  batch is not a
    # multiple of the tile on purpose to exercise the pad/slice path, and is
    # large enough to produce a multi-step (grid=(2,)) pipelined launch.
    batch = 1000
    state_dim = 11
    action_dim = 3
    hidden_dim = 32

    key = jax.random.PRNGKey(0)
    kp, kx, ka = jax.random.split(key, 3)

    params = init_discriminator_params(kp, state_dim, hidden_dim, action_dim)
    x = jax.random.normal(kx, (batch, state_dim), jnp.float32)
    a = jax.random.normal(ka, (batch, action_dim), jnp.float32)

    out = jax.block_until_ready(discriminator_forward(x, a, params))
    ref = _reference_forward(x, a, params)

    assert out.shape == (batch, 1)
    assert jnp.allclose(out, ref, atol=1e-5, rtol=1e-5)

    print("KERNEL_OK")
</pallas_src>

<mosaic_0001>
module attributes {stable_mosaic.version = 11 : i64} {
  func.func @_discriminator_kernel(%arg0: i32, %arg1: memref<512x11xf32, #tpu.memory_space<vmem>>, %arg2: memref<512x3xf32, #tpu.memory_space<vmem>>, %arg3: memref<11x32xf32, #tpu.memory_space<vmem>>, %arg4: memref<3x32xf32, #tpu.memory_space<vmem>>, %arg5: memref<1x32xf32, #tpu.memory_space<vmem>>, %arg6: memref<1x32xf32, #tpu.memory_space<vmem>>, %arg7: memref<1x1xf32, #tpu.memory_space<smem>>, %arg8: memref<1x512xf32, #tpu.memory_space<vmem>>) attributes {dimension_semantics = [#tpu.dimension_semantics<parallel>], iteration_bounds = array<i64: 2>, scalar_prefetch = 0 : i64, scratch_operands = 0 : i64, tpu.core_type = #tpu.core_type<tc>, window_params = [{transform_indices = @transform_0, window_bounds = array<i64: 512, 11>}, {transform_indices = @transform_1, window_bounds = array<i64: 512, 3>}, {pipeline_mode = #tpu.pipeline_mode<synchronous>, transform_indices = @transform_2, window_bounds = array<i64: 11, 32>}, {pipeline_mode = #tpu.pipeline_mode<synchronous>, transform_indices = @transform_3, window_bounds = array<i64: 3, 32>}, {pipeline_mode = #tpu.pipeline_mode<synchronous>, transform_indices = @transform_4, window_bounds = array<i64: 1, 32>}, {pipeline_mode = #tpu.pipeline_mode<synchronous>, transform_indices = @transform_5, window_bounds = array<i64: 1, 32>}, {transform_indices = @transform_6, window_bounds = array<i64: 1, 1>}, {transform_indices = @transform_7, window_bounds = array<i64: 1, 512>}]} {
    %c0 = arith.constant 0 : index
    %c0_0 = arith.constant 0 : index
    %0 = vector.load %arg1[%c0, %c0_0] : memref<512x11xf32, #tpu.memory_space<vmem>>, vector<512x11xf32>
    %c0_1 = arith.constant 0 : index
    %c0_2 = arith.constant 0 : index
    %1 = vector.load %arg3[%c0_1, %c0_2] : memref<11x32xf32, #tpu.memory_space<vmem>>, vector<11x32xf32>
    %cst = arith.constant dense<0.000000e+00> : vector<512x32xf32>
    %2 = tpu.matmul %0, %1, %cst {dimension_numbers = #tpu.dot_dimension_numbers<[1], [0], [0], [1], [0, 0, 1, 1], [], []>} : vector<512x11xf32>, vector<11x32xf32>, vector<512x32xf32> -> vector<512x32xf32>
    %c0_3 = arith.constant 0 : index
    %c0_4 = arith.constant 0 : index
    %3 = vector.load %arg2[%c0_3, %c0_4] : memref<512x3xf32, #tpu.memory_space<vmem>>, vector<512x3xf32>
    %c0_5 = arith.constant 0 : index
    %c0_6 = arith.constant 0 : index
    %4 = vector.load %arg4[%c0_5, %c0_6] : memref<3x32xf32, #tpu.memory_space<vmem>>, vector<3x32xf32>
    %cst_7 = arith.constant dense<0.000000e+00> : vector<512x32xf32>
    %5 = tpu.matmul %3, %4, %cst_7 {dimension_numbers = #tpu.dot_dimension_numbers<[1], [0], [0], [1], [0, 0, 1, 1], [], []>} : vector<512x3xf32>, vector<3x32xf32>, vector<512x32xf32> -> vector<512x32xf32>
    %6 = arith.addf %2, %5 : vector<512x32xf32>
    %c0_8 = arith.constant 0 : index
    %c0_9 = arith.constant 0 : index
    %7 = vector.load %arg5[%c0_8, %c0_9] : memref<1x32xf32, #tpu.memory_space<vmem>>, vector<1x32xf32>
    %8 = vector.broadcast %7 : vector<1x32xf32> to vector<512x32xf32>
    %9 = arith.addf %6, %8 : vector<512x32xf32>
    %10 = math.tanh %9 : vector<512x32xf32>
    %c0_10 = arith.constant 0 : index
    %c0_11 = arith.constant 0 : index
    %11 = vector.load %arg6[%c0_10, %c0_11] : memref<1x32xf32, #tpu.memory_space<vmem>>, vector<1x32xf32>
    %cst_12 = arith.constant dense<0.000000e+00> : vector<1x512xf32>
    %12 = tpu.matmul %11, %10, %cst_12 {dimension_numbers = #tpu.dot_dimension_numbers<[1], [1], [0], [0], [0, 0, 1, 0], [], []>} : vector<1x32xf32>, vector<512x32xf32>, vector<1x512xf32> -> vector<1x512xf32>
    %c0_13 = arith.constant 0 : index
    %c0_14 = arith.constant 0 : index
    %13 = memref.load %arg7[%c0_13, %c0_14] : memref<1x1xf32, #tpu.memory_space<smem>>
    %14 = vector.broadcast %13 : f32 to vector<1x512xf32>
    %15 = arith.addf %12, %14 : vector<1x512xf32>
    %16 = arith.negf %15 : vector<1x512xf32>
    %17 = math.exp %16 : vector<1x512xf32>
    %cst_15 = arith.constant 1.000000e+00 : f32
    %18 = vector.broadcast %cst_15 : f32 to vector<1x512xf32>
    %19 = arith.addf %18, %17 : vector<1x512xf32>
    %20 = arith.divf %18, %19 : vector<1x512xf32>
    %c0_16 = arith.constant 0 : index
    %c0_17 = arith.constant 0 : index
    %21 = vector.load %arg8[%c0_16, %c0_17] : memref<1x512xf32, #tpu.memory_space<vmem>>, vector<1x512xf32>
    tpu.vector_store %arg8[%c0_16, %c0_17], %20 {strides = array<i32>} : memref<1x512xf32, #tpu.memory_space<vmem>>, vector<1x512xf32>,
    return
  }
  func.func @transform_0(%arg0: i32) -> (i32, i32) {
    %c0_i32 = arith.constant 0 : i32
    %c0_i32_0 = arith.constant 0 : i32
    return %arg0, %c0_i32 : i32, i32
  }
  func.func @transform_1(%arg0: i32) -> (i32, i32) {
    %c0_i32 = arith.constant 0 : i32
    %c0_i32_0 = arith.constant 0 : i32
    return %arg0, %c0_i32 : i32, i32
  }
  func.func @transform_2(%arg0: i32) -> (i32, i32) {
    %c0_i32 = arith.constant 0 : i32
    %c0_i32_0 = arith.constant 0 : i32
    %c0_i32_1 = arith.constant 0 : i32
    return %c0_i32, %c0_i32_0 : i32, i32
  }
  func.func @transform_3(%arg0: i32) -> (i32, i32) {
    %c0_i32 = arith.constant 0 : i32
    %c0_i32_0 = arith.constant 0 : i32
    %c0_i32_1 = arith.constant 0 : i32
    return %c0_i32, %c0_i32_0 : i32, i32
  }
  func.func @transform_4(%arg0: i32) -> (i32, i32) {
    %c0_i32 = arith.constant 0 : i32
    %c0_i32_0 = arith.constant 0 : i32
    %c0_i32_1 = arith.constant 0 : i32
    return %c0_i32, %c0_i32_0 : i32, i32
  }
  func.func @transform_5(%arg0: i32) -> (i32, i32) {
    %c0_i32 = arith.constant 0 : i32
    %c0_i32_0 = arith.constant 0 : i32
    %c0_i32_1 = arith.constant 0 : i32
    return %c0_i32, %c0_i32_0 : i32, i32
  }
  func.func @transform_6(%arg0: i32) -> (i32, i32) {
    %c0_i32 = arith.constant 0 : i32
    %c0_i32_0 = arith.constant 0 : i32
    %c0_i32_1 = arith.constant 0 : i32
    return %c0_i32, %c0_i32_0 : i32, i32
  }
  func.func @transform_7(%arg0: i32) -> (i32, i32) {
    %c0_i32 = arith.constant 0 : i32
    %c0_i32_0 = arith.constant 0 : i32
    return %c0_i32, %arg0 : i32, i32
  }
}

</mosaic_0001>

<llo_original>
// kernel: tpu_custom_call.1
$region0: #{tpu_custom_call.1}
  #allocation0 [shape = 'u32[]', space=smem, size = 0x4, offset = 0x4, fixed_abs, tag = 'smem constant byte address 0x4 - core index']
  #allocation1 [shape = 'u32[144,128]{1,0:T(1,128)}', space=vmem, size = 0x12000, scoped, tag = 'internal scratch']
  #allocation2 [shape = 'f32[1,1]{1,0:T(1,128)S(6)}', space=smem, size = 0x200, scoped, tag = 'scoped memory for tpu_custom_call.1']
  %s0 = inlined_call_operand.vmem [shape: f32[1024,11], index: 0, kind: input, shape index: {}]
  %s1 = inlined_call_operand.vmem [shape: f32[1024,3], index: 1, kind: input, shape index: {}]
  %s2 = inlined_call_operand.vmem [shape: f32[11,32], index: 2, kind: input, shape index: {}]
  %s3 = inlined_call_operand.vmem [shape: f32[3,32], index: 3, kind: input, shape index: {}]
  %s4 = inlined_call_operand.vmem [shape: f32[1,32], index: 4, kind: input, shape index: {}]
  %s5 = inlined_call_operand.vmem [shape: f32[1,32], index: 5, kind: input, shape index: {}]
  %s6 = inlined_call_operand.<no memory space> [shape: f32[1,1], index: 6, kind: input, shape index: {}]
  %s7 = inlined_call_operand.hbm [shape: f32[1,1024], index: 7, kind: output, shape index: {}]
  %s8 = sld [smem:[#allocation0]]
  $region61: #{tpu_custom_call.1} parent=0
    _
  %s10 = ssub.s32 1, %s8
  %s11 = scalar_select 0, %s10, %s8
  %12 = sst [smem:[#allocation2]] %s6
  $region1: #{tpu_custom_call.1} parent=0
    #allocation3 [shape = 'u8[4096]{0}', space=vmem, size = 0x1000, scoped, tag = 'output window, operand 0']
    #allocation4 [shape = 's32[2]{0}', space=sflag, size = 0x8, scoped, tag = 'scoped memory for tpu_custom_call.1']
    %13 = vsyncpa [#allocation4], 0
    %s14 = scalar_lea.sflag [#allocation4], 1
    %15 = vsyncpa %s14, 0
    loop: start=0, step=1, limit=4
    $region2: #{tpu_custom_call.1} parent=1 // loop_pre_header
      _
    $region3: #{tpu_custom_call.1} parent=1 // loop_header
      %s17 = sphi 0, %s21
      %p18 = scmp.ge.s32.totalorder %s17, 4
      %s27 = sphi 0, %s29
      %s30 = sphi 0, %s27
      %s31 = sphi 0, %s30
      %s47 = sphi 0, %s31
      %s53 = sphi 0, %s55
      %s56 = sphi 0, %s53
      %s57 = sphi 0, %s56
      %s73 = sphi 0, %s57
      %s77 = sphi 0, %s77
      %s79 = sphi 0, %s77
      %s80 = sphi 0, %s79
      %s94 = sphi 0, %s80
      %s98 = sphi 0, %s98
      %s100 = sphi 0, %s98
      %s101 = sphi 0, %s100
      %s115 = sphi 0, %s101
      %s119 = sphi 0, %s119
      %s121 = sphi 0, %s119
      %s122 = sphi 0, %s121
      %s136 = sphi 0, %s122
      %s140 = sphi 0, %s140
      %s142 = sphi 0, %s140
      %s143 = sphi 0, %s142
      %s157 = sphi 0, %s143
      %s161 = sphi 0, %s161
      %s163 = sphi 0, %s161
      %s164 = sphi 0, %s163
      %s178 = sphi 0, %s164
      %s184 = sphi 0, %s186
      %s187 = sphi 0, %s184
      %s188 = sphi 0, %s187
      %s204 = sphi 0, %s188
    $region4: #{tpu_custom_call.1} parent=1 // loop_header_branch
      %20 = sbr.rel (%p18) target = $region8
    $region5: #{tpu_custom_call.1} parent=1 // loop_body
      %s22 = ssub.s32 %s17, 1
      %s23 = ssub.s32 %s17, 2
      %s24 = sadd.s32 %s17, 1
      %s25 = ssub.s32 %s17, %s24
      %p26 = scmp.eq.s32.totalorder %s25, 0
      %s28 = sadd.s32 %s27, 1
      %s29 = scalar_select %p26, %s27, %s28
      %p32 = pneg %p26
      %p33 = scmp.eq.s32.totalorder %s17, 1
      %p34 = por %p32, %p33
      %p35 = scmp.ne.s32.totalorder %s27, %s30
      %p36 = scmp.eq.s32.totalorder %s17, 0
      %p37 = por %p35, %p36
      %p38 = scmp.ne.s32.totalorder %s27, %s30
      %p39 = scmp.eq.s32.totalorder %s22, 1
      %p40 = por %p38, %p39
      %p41 = scmp.ne.s32.totalorder %s30, %s31
      %p42 = scmp.eq.s32.totalorder %s22, 0
      %p43 = por %p41, %p42
      %p44 = scmp.ne.s32.totalorder %s30, %s31
      %p45 = scmp.eq.s32.totalorder %s23, 1
      %p46 = por %p44, %p45
      %p48 = scmp.ne.s32.totalorder %s31, %s47
      %p49 = scmp.eq.s32.totalorder %s23, 0
      %p50 = por %p48, %p49
      %s51 = ssub.s32 %s17, %s24
      %p52 = scmp.eq.s32.totalorder %s51, 0
      %s54 = sadd.s32 %s53, 1
      %s55 = scalar_select %p52, %s53, %s54
      %p58 = pneg %p52
      %p59 = scmp.eq.s32.totalorder %s17, 1
      %p60 = por %p58, %p59
      %p61 = scmp.ne.s32.totalorder %s53, %s56
      %p62 = scmp.eq.s32.totalorder %s17, 0
      %p63 = por %p61, %p62
      %p64 = scmp.ne.s32.totalorder %s53, %s56
      %p65 = scmp.eq.s32.totalorder %s22, 1
      %p66 = por %p64, %p65
      %p67 = scmp.ne.s32.totalorder %s56, %s57
      %p68 = scmp.eq.s32.totalorder %s22, 0
      %p69 = por %p67, %p68
      %p70 = scmp.ne.s32.totalorder %s56, %s57
      %p71 = scmp.eq.s32.totalorder %s23, 1
      %p72 = por %p70, %p71
      %p74 = scmp.ne.s32.totalorder %s57, %s73
      %p75 = scmp.eq.s32.totalorder %s23, 0
      %p76 = por %p74, %p75
      %s78 = sadd.s32 %s77, 1
      %p81 = scmp.eq.s32.totalorder %s17, 1
      %p82 = scmp.ne.s32.totalorder %s77, %s79
      %p83 = scmp.eq.s32.totalorder %s17, 0
      %p84 = por %p82, %p83
      %p85 = scmp.ne.s32.totalorder %s77, %s79
      %p86 = scmp.eq.s32.totalorder %s22, 1
      %p87 = por %p85, %p86
      %p88 = scmp.ne.s32.totalorder %s79, %s80
      %p89 = scmp.eq.s32.totalorder %s22, 0
      %p90 = por %p88, %p89
      %p91 = scmp.ne.s32.totalorder %s79, %s80
      %p92 = scmp.eq.s32.totalorder %s23, 1
      %p93 = por %p91, %p92
      %p95 = scmp.ne.s32.totalorder %s80, %s94
      %p96 = scmp.eq.s32.totalorder %s23, 0
      %p97 = por %p95, %p96
      %s99 = sadd.s32 %s98, 1
      %p102 = scmp.eq.s32.totalorder %s17, 1
      %p103 = scmp.ne.s32.totalorder %s98, %s100
      %p104 = scmp.eq.s32.totalorder %s17, 0
      %p105 = por %p103, %p104
      %p106 = scmp.ne.s32.totalorder %s98, %s100
      %p107 = scmp.eq.s32.totalorder %s22, 1
      %p108 = por %p106, %p107
      %p109 = scmp.ne.s32.totalorder %s100, %s101
      %p110 = scmp.eq.s32.totalorder %s22, 0
      %p111 = por %p109, %p110
      %p112 = scmp.ne.s32.totalorder %s100, %s101
      %p113 = scmp.eq.s32.totalorder %s23, 1
      %p114 = por %p112, %p113
      %p116 = scmp.ne.s32.totalorder %s101, %s115
      %p117 = scmp.eq.s32.totalorder %s23, 0
      %p118 = por %p116, %p117
      %s120 = sadd.s32 %s119, 1
      %p123 = scmp.eq.s32.totalorder %s17, 1
      %p124 = scmp.ne.s32.totalorder %s119, %s121
      %p125 = scmp.eq.s32.totalorder %s17, 0
      %p126 = por %p124, %p125
      %p127 = scmp.ne.s32.totalorder %s119, %s121
      %p128 = scmp.eq.s32.totalorder %s22, 1
      %p129 = por %p127, %p128
      %p130 = scmp.ne.s32.totalorder %s121, %s122
      %p131 = scmp.eq.s32.totalorder %s22, 0
      %p132 = por %p130, %p131
      %p133 = scmp.ne.s32.totalorder %s121, %s122
      %p134 = scmp.eq.s32.totalorder %s23, 1
      %p135 = por %p133, %p134
      %p137 = scmp.ne.s32.totalorder %s122, %s136
      %p138 = scmp.eq.s32.totalorder %s23, 0
      %p139 = por %p137, %p138
      %s141 = sadd.s32 %s140, 1
      %p144 = scmp.eq.s32.totalorder %s17, 1
      %p145 = scmp.ne.s32.totalorder %s140, %s142
      %p146 = scmp.eq.s32.totalorder %s17, 0
      %p147 = por %p145, %p146
      %p148 = scmp.ne.s32.totalorder %s140, %s142
      %p149 = scmp.eq.s32.totalorder %s22, 1
      %p150 = por %p148, %p149
      %p151 = scmp.ne.s32.totalorder %s142, %s143
      %p152 = scmp.eq.s32.totalorder %s22, 0
      %p153 = por %p151, %p152
      %p154 = scmp.ne.s32.totalorder %s142, %s143
      %p155 = scmp.eq.s32.totalorder %s23, 1
      %p156 = por %p154, %p155
      %p158 = scmp.ne.s32.totalorder %s143, %s157
      %p159 = scmp.eq.s32.totalorder %s23, 0
      %p160 = por %p158, %p159
      %s162 = sadd.s32 %s161, 1
      %p165 = scmp.eq.s32.totalorder %s17, 1
      %p166 = scmp.ne.s32.totalorder %s161, %s163
      %p167 = scmp.eq.s32.totalorder %s17, 0
      %p168 = por %p166, %p167
      %p169 = scmp.ne.s32.totalorder %s161, %s163
      %p170 = scmp.eq.s32.totalorder %s22, 1
      %p171 = por %p169, %p170
      %p172 = scmp.ne.s32.totalorder %s163, %s164
      %p173 = scmp.eq.s32.totalorder %s22, 0
      %p174 = por %p172, %p173
      %p175 = scmp.ne.s32.totalorder %s163, %s164
      %p176 = scmp.eq.s32.totalorder %s23, 1
      %p177 = por %p175, %p176
      %p179 = scmp.ne.s32.totalorder %s164, %s178
      %p180 = scmp.eq.s32.totalorder %s23, 0
      %p181 = por %p179, %p180
      %s182 = ssub.s32 %s17, %s24
      %p183 = scmp.eq.s32.totalorder %s182, 0
      %s185 = sadd.s32 %s184, 1
      %s186 = scalar_select %p183, %s184, %s185
      %p189 = pneg %p183
      %p190 = scmp.eq.s32.totalorder %s17, 1
      %p191 = por %p189, %p190
      %p192 = scmp.ne.s32.totalorder %s184, %s187
      %p193 = scmp.eq.s32.totalorder %s17, 0
      %p194 = por %p192, %p193
      %p195 = scmp.ne.s32.totalorder %s184, %s187
      %p196 = scmp.eq.s32.totalorder %s22, 1
      %p197 = por %p195, %p196
      %p198 = scmp.ne.s32.totalorder %s187, %s188
      %p199 = scmp.eq.s32.totalorder %s22, 0
      %p200 = por %p198, %p199
      %p201 = scmp.ne.s32.totalorder %s187, %s188
      %p202 = scmp.eq.s32.totalorder %s23, 1
      %p203 = por %p201, %p202
      %p205 = scmp.ne.s32.totalorder %s188, %s204
      %p206 = scmp.eq.s32.totalorder %s23, 0
      %p207 = por %p205, %p206
      %p208 = scmp.le.s32.totalorder 1, %s17
      %p209 = scmp.lt.s32.totalorder %s17, 3
      %p210 = pnand %p208, %p209
      %p211 = pneg %p210
      // Predicated region
      $region9: #{tpu_custom_call.1} parent=5 // pred_check
        _
      $region10: #{tpu_custom_call.1} parent=5 // pred_check_branch
        %213 = sbr.rel (%p210) target = $region12
      $region11: #{tpu_custom_call.1} parent=5 // pred_region
        %s214 = ssub.s32 %s17, 1
        // Predicated region
        $region13: #{tpu_custom_call.1} parent=11 // pred_check
          %p215 = pneg %p90
        $region14: #{tpu_custom_call.1} parent=11 // pred_check_branch
          %217 = sbr.rel (%p215) target = $region16
        $region15: #{tpu_custom_call.1} parent=11 // pred_region
          _
        $region16: #{tpu_custom_call.1} parent=11 // pred_fallthru
          _
        // Predicated region
        $region17: #{tpu_custom_call.1} parent=11 // pred_check
          %p218 = pneg %p111
        $region18: #{tpu_custom_call.1} parent=11 // pred_check_branch
          %220 = sbr.rel (%p218) target = $region20
        $region19: #{tpu_custom_call.1} parent=11 // pred_region
          _
        $region20: #{tpu_custom_call.1} parent=11 // pred_fallthru
          _
        // Predicated region
        $region21: #{tpu_custom_call.1} parent=11 // pred_check
          %p221 = pneg %p132
        $region22: #{tpu_custom_call.1} parent=11 // pred_check_branch
          %223 = sbr.rel (%p221) target = $region24
        $region23: #{tpu_custom_call.1} parent=11 // pred_region
          _
        $region24: #{tpu_custom_call.1} parent=11 // pred_fallthru
          _
        // Predicated region
        $region25: #{tpu_custom_call.1} parent=11 // pred_check
          %p224 = pneg %p153
        $region26: #{tpu_custom_call.1} parent=11 // pred_check_branch
          %226 = sbr.rel (%p224) target = $region28
        $region27: #{tpu_custom_call.1} parent=11 // pred_region
          _
        $region28: #{tpu_custom_call.1} parent=11 // pred_fallthru
          _
        // Predicated region
        $region29: #{tpu_custom_call.1} parent=11 // pred_check
          %p227 = pneg %p174
        $region30: #{tpu_custom_call.1} parent=11 // pred_check_branch
          %229 = sbr.rel (%p227) target = $region32
        $region31: #{tpu_custom_call.1} parent=11 // pred_region
          _
        $region32: #{tpu_custom_call.1} parent=11 // pred_fallthru
          _
      $region12: #{tpu_custom_call.1} parent=5 // pred_fallthru
        _
      %p230 = scmp.lt.s32.totalorder %s17, 2
      // Predicated region
      $region33: #{tpu_custom_call.1} parent=5 // pred_check
        %p231 = pneg %p230
      $region34: #{tpu_custom_call.1} parent=5 // pred_check_branch
        %233 = sbr.rel (%p231) target = $region36
      $region35: #{tpu_custom_call.1} parent=5 // pred_region
        // Predicated region
        $region37: #{tpu_custom_call.1} parent=35 // pred_check
          %p234 = pneg %p37
        $region38: #{tpu_custom_call.1} parent=35 // pred_check_branch
          %236 = sbr.rel (%p234) target = $region40
        $region39: #{tpu_custom_call.1} parent=35 // pred_region
          %s237 = smul.u32 64, %s17
          %p238 = scmp.lt.s32.totalorder %s237, 127
          %s239 = scalar_select %p238, %s237, 127
          %s240 = smul.addr %s239, 8
          %s241 = scalar_lea.vmem %s0, %s240
          %s242 = smul.u32 64, %s17
        $region40: #{tpu_custom_call.1} parent=35 // pred_fallthru
          _
        // Predicated region
        $region41: #{tpu_custom_call.1} parent=35 // pred_check
          %p243 = pneg %p63
        $region42: #{tpu_custom_call.1} parent=35 // pred_check_branch
          %245 = sbr.rel (%p243) target = $region44
        $region43: #{tpu_custom_call.1} parent=35 // pred_region
          %s246 = smul.u32 64, %s17
          %p247 = scmp.lt.s32.totalorder %s246, 127
          %s248 = scalar_select %p247, %s246, 127
          %s249 = smul.addr %s248, 8
          %s250 = scalar_lea.vmem %s1, %s249
          %s251 = smul.u32 64, %s17
        $region44: #{tpu_custom_call.1} parent=35 // pred_fallthru
          _
      $region36: #{tpu_custom_call.1} parent=5 // pred_fallthru
        _
      %p252 = scmp.le.s32.totalorder 1, %s17
      %p253 = scmp.lt.s32.totalorder %s17, 3
      %p254 = pnand %p252, %p253
      %p255 = pneg %p254
      // Predicated region
      $region45: #{tpu_custom_call.1} parent=5 // pred_check
        _
      $region46: #{tpu_custom_call.1} parent=5 // pred_check_branch
        %257 = sbr.rel (%p254) target = $region48
      $region47: #{tpu_custom_call.1} parent=5 // pred_region
        %s258 = ssub.s32 %s17, 1
        %s259 = smul.u32 64, %s22
        %p260 = scmp.lt.s32.totalorder %s259, 127
        %s261 = scalar_select %p260, %s259, 127
        %s262 = smul.addr %s261, 8
        %s263 = scalar_lea.vmem %s0, %s262
        %p264 = pneg %p43
        %p265 = pneg %p40
        %s266 = smul.u32 64, %s22
        %p267 = scmp.lt.s32.totalorder %s266, 127
        %s268 = scalar_select %p267, %s266, 127
        %s269 = smul.addr %s268, 8
        %s270 = scalar_lea.vmem %s1, %s269
        %p271 = pneg %p69
        %p272 = pneg %p66
        %p273 = pneg %p90
        %p274 = pneg %p87
        %p275 = pneg %p111
        %p276 = pneg %p108
        %p277 = pneg %p132
        %p278 = pneg %p129
        %p279 = pneg %p153
        %p280 = pneg %p150
        %p281 = pneg %p174
        %p282 = pneg %p171
        %p283 = pneg %p200
        %p284 = pneg %p197
        %s285 = sand.u32 %s187, 1
        %s286 = scalar_lea.sflag [#allocation4], %s285
        %s287 = sand.u32 %s187, 1
        %s288 = smul.addr %s287, 4
        %s289 = scalar_lea.vmem [#allocation3], %s288
        %s290 = smul.u32 64, %s22
        %p291 = scmp.lt.s32.totalorder %s290, 127
        %s292 = scalar_select %p291, %s290, 127
        %s293 = smul.addr %s292, 8
        %s294 = scalar_lea.vmem %s0, %s293
        %s295 = smul.u32 64, %s22
        %s296 = smul.u32 64, %s22
        %p297 = scmp.lt.s32.totalorder %s296, 127
        %s298 = scalar_select %p297, %s296, 127
        %s299 = smul.addr %s298, 8
        %s300 = scalar_lea.vmem %s1, %s299
        %s301 = smul.u32 64, %s22
        %s302 = smul.u32 4, %s22
        %v303 = vld [vmem:[%s294] sm:$0xff]
        %v304 = vld [vmem:[%s294 + $0x8] sm:$0xff]
        %v305 = vld [vmem:[%s294 + $0x10] sm:$0xff]
        %v306 = vld [vmem:[%s294 + $0x18] sm:$0xff]
        %v307 = vld [vmem:[%s294 + $0x20] sm:$0xff]
        %v308 = vld [vmem:[%s294 + $0x28] sm:$0xff]
        %v309 = vld [vmem:[%s294 + $0x30] sm:$0xff]
        %v310 = vld [vmem:[%s294 + $0x38] sm:$0xff]
        %v311 = vld [vmem:[%s294 + $0x40] sm:$0xff]
        %v312 = vld [vmem:[%s294 + $0x48] sm:$0xff]
        %v313 = vld [vmem:[%s294 + $0x50] sm:$0xff]
        %v314 = vld [vmem:[%s294 + $0x58] sm:$0xff]
        %v315 = vld [vmem:[%s294 + $0x60] sm:$0xff]
        %v316 = vld [vmem:[%s294 + $0x68] sm:$0xff]
        %v317 = vld [vmem:[%s294 + $0x70] sm:$0xff]
        %v318 = vld [vmem:[%s294 + $0x78] sm:$0xff]
        %v319 = vld [vmem:[%s294 + $0x80] sm:$0xff]
        %v320 = vld [vmem:[%s294 + $0x88] sm:$0xff]
        %v321 = vld [vmem:[%s294 + $0x90] sm:$0xff]
        %v322 = vld [vmem:[%s294 + $0x98] sm:$0xff]
        %v323 = vld [vmem:[%s294 + $0xa0] sm:$0xff]
        %v324 = vld [vmem:[%s294 + $0xa8] sm:$0xff]
        %v325 = vld [vmem:[%s294 + $0xb0] sm:$0xff]
        %v326 = vld [vmem:[%s294 + $0xb8] sm:$0xff]
        %v327 = vld [vmem:[%s294 + $0xc0] sm:$0xff]
        %v328 = vld [vmem:[%s294 + $0xc8] sm:$0xff]
        %v329 = vld [vmem:[%s294 + $0xd0] sm:$0xff]
        %v330 = vld [vmem:[%s294 + $0xd8] sm:$0xff]
        %v331 = vld [vmem:[%s294 + $0xe0] sm:$0xff]
        %v332 = vld [vmem:[%s294 + $0xe8] sm:$0xff]
        %v333 = vld [vmem:[%s294 + $0xf0] sm:$0xff]
        %v334 = vld [vmem:[%s294 + $0xf8] sm:$0xff]
        %v335 = vld [vmem:[%s294 + $0x100] sm:$0xff]
        %v336 = vld [vmem:[%s294 + $0x108] sm:$0xff]
        %v337 = vld [vmem:[%s294 + $0x110] sm:$0xff]
        %v338 = vld [vmem:[%s294 + $0x118] sm:$0xff]
        %v339 = vld [vmem:[%s294 + $0x120] sm:$0xff]
        %v340 = vld [vmem:[%s294 + $0x128] sm:$0xff]
        %v341 = vld [vmem:[%s294 + $0x130] sm:$0xff]
        %v342 = vld [vmem:[%s294 + $0x138] sm:$0xff]
        %v343 = vld [vmem:[%s294 + $0x140] sm:$0xff]
        %v344 = vld [vmem:[%s294 + $0x148] sm:$0xff]
        %v345 = vld [vmem:[%s294 + $0x150] sm:$0xff]
        %v346 = vld [vmem:[%s294 + $0x158] sm:$0xff]
        %v347 = vld [vmem:[%s294 + $0x160] sm:$0xff]
        %v348 = vld [vmem:[%s294 + $0x168] sm:$0xff]
        %v349 = vld [vmem:[%s294 + $0x170] sm:$0xff]
        %v350 = vld [vmem:[%s294 + $0x178] sm:$0xff]
        %v351 = vld [vmem:[%s294 + $0x180] sm:$0xff]
        %v352 = vld [vmem:[%s294 + $0x188] sm:$0xff]
        %v353 = vld [vmem:[%s294 + $0x190] sm:$0xff]
        %v354 = vld [vmem:[%s294 + $0x198] sm:$0xff]
        %v355 = vld [vmem:[%s294 + $0x1a0] sm:$0xff]
        %v356 = vld [vmem:[%s294 + $0x1a8] sm:$0xff]
        %v357 = vld [vmem:[%s294 + $0x1b0] sm:$0xff]
        %v358 = vld [vmem:[%s294 + $0x1b8] sm:$0xff]
        %v359 = vld [vmem:[%s294 + $0x1c0] sm:$0xff]
        %v360 = vld [vmem:[%s294 + $0x1c8] sm:$0xff]
        %v361 = vld [vmem:[%s294 + $0x1d0] sm:$0xff]
        %v362 = vld [vmem:[%s294 + $0x1d8] sm:$0xff]
        %v363 = vld [vmem:[%s294 + $0x1e0] sm:$0xff]
        %v364 = vld [vmem:[%s294 + $0x1e8] sm:$0xff]
        %v365 = vld [vmem:[%s294 + $0x1f0] sm:$0xff]
        %v366 = vld [vmem:[%s294 + $0x1f8] sm:$0xff]
        %v367 = vld [vmem:[%s2] sm:$0xff]
        %v368 = vld [vmem:[%s2 + $0x8] sm:$0x7]
        %v369 = vld [vmem:[%s300] sm:$0xff]
        %v370 = vld [vmem:[%s300 + $0x8] sm:$0xff]
        %v371 = vld [vmem:[%s300 + $0x10] sm:$0xff]
        %v372 = vld [vmem:[%s300 + $0x18] sm:$0xff]
        %v373 = vld [vmem:[%s300 + $0x20] sm:$0xff]
        %v374 = vld [vmem:[%s300 + $0x28] sm:$0xff]
        %v375 = vld [vmem:[%s300 + $0x30] sm:$0xff]
        %v376 = vld [vmem:[%s300 + $0x38] sm:$0xff]
        %v377 = vld [vmem:[%s300 + $0x40] sm:$0xff]
        %v378 = vld [vmem:[%s300 + $0x48] sm:$0xff]
        %v379 = vld [vmem:[%s300 + $0x50] sm:$0xff]
        %v380 = vld [vmem:[%s300 + $0x58] sm:$0xff]
        %v381 = vld [vmem:[%s300 + $0x60] sm:$0xff]
        %v382 = vld [vmem:[%s300 + $0x68] sm:$0xff]
        %v383 = vld [vmem:[%s300 + $0x70] sm:$0xff]
        %v384 = vld [vmem:[%s300 + $0x78] sm:$0xff]
        %v385 = vld [vmem:[%s300 + $0x80] sm:$0xff]
        %v386 = vld [vmem:[%s300 + $0x88] sm:$0xff]
        %v387 = vld [vmem:[%s300 + $0x90] sm:$0xff]
        %v388 = vld [vmem:[%s300 + $0x98] sm:$0xff]
        %v389 = vld [vmem:[%s300 + $0xa0] sm:$0xff]
        %v390 = vld [vmem:[%s300 + $0xa8] sm:$0xff]
        %v391 = vld [vmem:[%s300 + $0xb0] sm:$0xff]
        %v392 = vld [vmem:[%s300 + $0xb8] sm:$0xff]
        %v393 = vld [vmem:[%s300 + $0xc0] sm:$0xff]
        %v394 = vld [vmem:[%s300 + $0xc8] sm:$0xff]
        %v395 = vld [vmem:[%s300 + $0xd0] sm:$0xff]
        %v396 = vld [vmem:[%s300 + $0xd8] sm:$0xff]
        %v397 = vld [vmem:[%s300 + $0xe0] sm:$0xff]
        %v398 = vld [vmem:[%s300 + $0xe8] sm:$0xff]
        %v399 = vld [vmem:[%s300 + $0xf0] sm:$0xff]
        %v400 = vld [vmem:[%s300 + $0xf8] sm:$0xff]
        %v401 = vld [vmem:[%s300 + $0x100] sm:$0xff]
        %v402 = vld [vmem:[%s300 + $0x108] sm:$0xff]
        %v403 = vld [vmem:[%s300 + $0x110] sm:$0xff]
        %v404 = vld [vmem:[%s300 + $0x118] sm:$0xff]
        %v405 = vld [vmem:[%s300 + $0x120] sm:$0xff]
        %v406 = vld [vmem:[%s300 + $0x128] sm:$0xff]
        %v407 = vld [vmem:[%s300 + $0x130] sm:$0xff]
        %v408 = vld [vmem:[%s300 + $0x138] sm:$0xff]
        %v409 = vld [vmem:[%s300 + $0x140] sm:$0xff]
        %v410 = vld [vmem:[%s300 + $0x148] sm:$0xff]
        %v411 = vld [vmem:[%s300 + $0x150] sm:$0xff]
        %v412 = vld [vmem:[%s300 + $0x158] sm:$0xff]
        %v413 = vld [vmem:[%s300 + $0x160] sm:$0xff]
        %v414 = vld [vmem:[%s300 + $0x168] sm:$0xff]
        %v415 = vld [vmem:[%s300 + $0x170] sm:$0xff]
        %v416 = vld [vmem:[%s300 + $0x178] sm:$0xff]
        %v417 = vld [vmem:[%s300 + $0x180] sm:$0xff]
        %v418 = vld [vmem:[%s300 + $0x188] sm:$0xff]
        %v419 = vld [vmem:[%s300 + $0x190] sm:$0xff]
        %v420 = vld [vmem:[%s300 + $0x198] sm:$0xff]
        %v421 = vld [vmem:[%s300 + $0x1a0] sm:$0xff]
        %v422 = vld [vmem:[%s300 + $0x1a8] sm:$0xff]
        %v423 = vld [vmem:[%s300 + $0x1b0] sm:$0xff]
        %v424 = vld [vmem:[%s300 + $0x1b8] sm:$0xff]
        %v425 = vld [vmem:[%s300 + $0x1c0] sm:$0xff]
        %v426 = vld [vmem:[%s300 + $0x1c8] sm:$0xff]
        %v427 = vld [vmem:[%s300 + $0x1d0] sm:$0xff]
        %v428 = vld [vmem:[%s300 + $0x1d8] sm:$0xff]
        %v429 = vld [vmem:[%s300 + $0x1e0] sm:$0xff]
        %v430 = vld [vmem:[%s300 + $0x1e8] sm:$0xff]
        %v431 = vld [vmem:[%s300 + $0x1f0] sm:$0xff]
        %v432 = vld [vmem:[%s300 + $0x1f8] sm:$0xff]
        %v433 = vld [vmem:[%s3] sm:$0x7]
        %vm434 = vcmask 23552
        %v436 = vsel %vm434, %v369, 0
        %v439 = vsel %vm434, %v370, 0
        %v442 = vsel %vm434, %v371, 0
        %v445 = vsel %vm434, %v372, 0
        %v448 = vsel %vm434, %v373, 0
        %v451 = vsel %vm434, %v374, 0
        %v454 = vsel %vm434, %v375, 0
        %v457 = vsel %vm434, %v376, 0
        %v460 = vsel %vm434, %v377, 0
        %v463 = vsel %vm434, %v378, 0
        %v466 = vsel %vm434, %v379, 0
        %v469 = vsel %vm434, %v380, 0
        %v472 = vsel %vm434, %v381, 0
        %v475 = vsel %vm434, %v382, 0
        %v478 = vsel %vm434, %v383, 0
        %v481 = vsel %vm434, %v384, 0
        %v484 = vsel %vm434, %v385, 0
        %v487 = vsel %vm434, %v386, 0
        %v490 = vsel %vm434, %v387, 0
        %v493 = vsel %vm434, %v388, 0
        %v496 = vsel %vm434, %v389, 0
        %v499 = vsel %vm434, %v390, 0
        %v502 = vsel %vm434, %v391, 0
        %v505 = vsel %vm434, %v392, 0
        %v508 = vsel %vm434, %v393, 0
        %v511 = vsel %vm434, %v394, 0
        %v514 = vsel %vm434, %v395, 0
        %v517 = vsel %vm434, %v396, 0
        %v520 = vsel %vm434, %v397, 0
        %v523 = vsel %vm434, %v398, 0
        %v526 = vsel %vm434, %v399, 0
        %v529 = vsel %vm434, %v400, 0
        %v532 = vsel %vm434, %v401, 0
        %v535 = vsel %vm434, %v402, 0
        %v538 = vsel %vm434, %v403, 0
        %v541 = vsel %vm434, %v404, 0
        %v544 = vsel %vm434, %v405, 0
        %v547 = vsel %vm434, %v406, 0
        %v550 = vsel %vm434, %v407, 0
        %v553 = vsel %vm434, %v408, 0
        %v556 = vsel %vm434, %v409, 0
        %v559 = vsel %vm434, %v410, 0
        %v562 = vsel %vm434, %v411, 0
        %v565 = vsel %vm434, %v412, 0
        %v568 = vsel %vm434, %v413, 0
        %v571 = vsel %vm434, %v414, 0
        %v574 = vsel %vm434, %v415, 0
        %v577 = vsel %vm434, %v416, 0
        %v580 = vsel %vm434, %v417, 0
        %v583 = vsel %vm434, %v418, 0
        %v586 = vsel %vm434, %v419, 0
        %v589 = vsel %vm434, %v420, 0
        %v592 = vsel %vm434, %v421, 0
        %v595 = vsel %vm434, %v422, 0
        %v598 = vsel %vm434, %v423, 0
        %v601 = vsel %vm434, %v424, 0
        %v604 = vsel %vm434, %v425, 0
        %v607 = vsel %vm434, %v426, 0
        %v610 = vsel %vm434, %v427, 0
        %v613 = vsel %vm434, %v428, 0
        %v616 = vsel %vm434, %v429, 0
        %v619 = vsel %vm434, %v430, 0
        %v622 = vsel %vm434, %v431, 0
        %v625 = vsel %vm434, %v432, 0
        %vm627 = vcmask 1042432
        %v629 = vsel %vm627, %v433, 0
        %631 = vmatprep.subr.mxu0 0.0
        %632 = vmatpush1.msra.mxu0 %v629
        %633 = vmatprep.subr.mxu0 0.0
        %634 = vmatpush1.msra.mxu0 0.0
        %635 = vmatprep.subr.mxu0 0.0
        %636 = vmatpush1.msra.mxu0 0.0
        %637 = vmatprep.subr.mxu0 0.0
        %638 = vmatpush1.msra.mxu0 0.0
        %639 = vmatprep.subr.mxu0 0.0
        %640 = vmatpush1.msra.mxu0 0.0
        %641 = vmatprep.subr.mxu0 0.0
        %642 = vmatpush1.msra.mxu0 0.0
        %643 = vmatprep.subr.mxu0 0.0
        %644 = vmatpush1.msra.mxu0 0.0
        %645 = vmatprep.subr.mxu0 0.0
        %646 = vmatpush1.msra.mxu0 0.0
        %647 = vmatprep.subr.mxu0 0.0
        %648 = vmatpush1.msra.mxu0 0.0
        %649 = vmatprep.subr.mxu0 0.0
        %650 = vmatpush1.msra.mxu0 0.0
        %651 = vmatprep.subr.mxu0 0.0
        %652 = vmatpush1.msra.mxu0 0.0
        %653 = vmatprep.subr.mxu0 0.0
        %654 = vmatpush1.msra.mxu0 0.0
        %655 = vmatprep.subr.mxu0 0.0
        %656 = vmatpush1.msra.mxu0 0.0
        %657 = vmatprep.subr.mxu0 0.0
        %658 = vmatpush1.msra.mxu0 0.0
        %659 = vmatprep.subr.mxu0 0.0
        %660 = vmatpush1.msra.mxu0 0.0
        %661 = vmatprep.subr.mxu0 0.0
        %662 = vmatpush1.msra.mxu0 0.0
        %663 = vmatprep.subr.mxu0 0.0
        %664 = vmatpush1.msra.mxu0 0.0
        %665 = vmatprep.subr.mxu0 0.0
        %666 = vmatpush1.msra.mxu0 0.0
        %667 = vmatprep.subr.mxu0 0.0
        %668 = vmatpush1.msra.mxu0 0.0
        %669 = vmatprep.subr.mxu0 0.0
        %670 = vmatpush1.msra.mxu0 0.0
        %671 = vmatprep.subr.mxu0 0.0
        %672 = vmatpush1.msra.mxu0 0.0
        %673 = vmatprep.subr.mxu0 0.0
        %674 = vmatpush1.msra.mxu0 0.0
        %675 = vmatprep.subr.mxu0 0.0
        %676 = vmatpush1.msra.mxu0 0.0
        %677 = vmatprep.subr.mxu0 0.0
        %678 = vmatpush1.msra.mxu0 0.0
        %679 = vmatprep.subr.mxu0 0.0
        %680 = vmatpush1.msra.mxu0 0.0
        %681 = vmatprep.subr.mxu0 0.0
        %682 = vmatpush1.msra.mxu0 0.0
        %683 = vmatprep.subr.mxu0 0.0
        %684 = vmatpush1.msra.mxu0 0.0
        %685 = vmatprep.subr.mxu0 0.0
        %686 = vmatpush1.msra.mxu0 0.0
        %687 = vmatprep.subr.mxu0 0.0
        %688 = vmatpush1.msra.mxu0 0.0
        %689 = vmatprep.subr.mxu0 0.0
        %690 = vmatpush1.msra.mxu0 0.0
        %691 = vmatprep.subr.mxu0 0.0
        %692 = vmatpush1.msra.mxu0 0.0
        %693 = vmatprep.subr.mxu0 0.0
        %694 = vmatpush1.msra.mxu0 0.0
        %695 = vmatprep.mubr.f32.mxu0 0.0
        %696 = vmatmul.mubr.f32.gmra.mrb[0].mxu0 %v436
        %v697 = vpop.f32.mrb[0].mxu0
        %v698 = vadd.f32 0.0, %v697
        %v699 = vpop.f32.mrb[0].mxu0
        %700 = vmatprep.mubr.f32.mxu0 0.0
        %701 = vmatmul.mubr.f32.gmra.mrb[0].mxu0 %v439
        %v702 = vpop.f32.mrb[0].mxu0
        %v703 = vadd.f32 0.0, %v702
        %v704 = vpop.f32.mrb[0].mxu0
        %705 = vmatprep.mubr.f32.mxu0 0.0
        %706 = vmatmul.mubr.f32.gmra.mrb[0].mxu0 %v442
        %v707 = vpop.f32.mrb[0].mxu0
        %v708 = vadd.f32 0.0, %v707
        %v709 = vpop.f32.mrb[0].mxu0
        %710 = vmatprep.mubr.f32.mxu0 0.0
        %711 = vmatmul.mubr.f32.gmra.mrb[0].mxu0 %v445
        %v712 = vpop.f32.mrb[0].mxu0
        %v713 = vadd.f32 0.0, %v712
        %v714 = vpop.f32.mrb[0].mxu0
        %715 = vmatprep.mubr.f32.mxu0 0.0
        %716 = vmatmul.mubr.f32.gmra.mrb[0].mxu0 %v448
        %v717 = vpop.f32.mrb[0].mxu0
        %v718 = vadd.f32 0.0, %v717
        %v719 = vpop.f32.mrb[0].mxu0
        %720 = vmatprep.mubr.f32.mxu0 0.0
        %721 = vmatmul.mubr.f32.gmra.mrb[0].mxu0 %v451
        %v722 = vpop.f32.mrb[0].mxu0
        %v723 = vadd.f32 0.0, %v722
        %v724 = vpop.f32.mrb[0].mxu0
        %725 = vmatprep.mubr.f32.mxu0 0.0
        %726 = vmatmul.mubr.f32.gmra.mrb[0].mxu0 %v454
        %v727 = vpop.f32.mrb[0].mxu0
        %v728 = vadd.f32 0.0, %v727
        %v729 = vpop.f32.mrb[0].mxu0
        %730 = vmatprep.mubr.f32.mxu0 0.0
        %731 = vmatmul.mubr.f32.gmra.mrb[0].mxu0 %v457
        %v732 = vpop.f32.mrb[0].mxu0
        %v733 = vadd.f32 0.0, %v732
        %v734 = vpop.f32.mrb[0].mxu0
        %735 = vmatprep.mubr.f32.mxu0 0.0
        %736 = vmatmul.mubr.f32.gmra.mrb[0].mxu0 %v460
        %v737 = vpop.f32.mrb[0].mxu0
        %v738 = vadd.f32 0.0, %v737
        %v739 = vpop.f32.mrb[0].mxu0
        %740 = vmatprep.mubr.f32.mxu0 0.0
        %741 = vmatmul.mubr.f32.gmra.mrb[0].mxu0 %v463
        %v742 = vpop.f32.mrb[0].mxu0
        %v743 = vadd.f32 0.0, %v742
        %v744 = vpop.f32.mrb[0].mxu0
        %745 = vmatprep.mubr.f32.mxu0 0.0
        %746 = vmatmul.mubr.f32.gmra.mrb[0].mxu0 %v466
        %v747 = vpop.f32.mrb[0].mxu0
        %v748 = vadd.f32 0.0, %v747
        %v749 = vpop.f32.mrb[0].mxu0
        %750 = vmatprep.mubr.f32.mxu0 0.0
        %751 = vmatmul.mubr.f32.gmra.mrb[0].mxu0 %v469
        %v752 = vpop.f32.mrb[0].mxu0
        %v753 = vadd.f32 0.0, %v752
        %v754 = vpop.f32.mrb[0].mxu0
        %755 = vmatprep.mubr.f32.mxu0 0.0
        %756 = vmatmul.mubr.f32.gmra.mrb[0].mxu0 %v472
        %v757 = vpop.f32.mrb[0].mxu0
        %v758 = vadd.f32 0.0, %v757
        %v759 = vpop.f32.mrb[0].mxu0
        %760 = vmatprep.mubr.f32.mxu0 0.0
        %761 = vmatmul.mubr.f32.gmra.mrb[0].mxu0 %v475
        %v762 = vpop.f32.mrb[0].mxu0
        %v763 = vadd.f32 0.0, %v762
        %v764 = vpop.f32.mrb[0].mxu0
        %765 = vmatprep.mubr.f32.mxu0 0.0
        %766 = vmatmul.mubr.f32.gmra.mrb[0].mxu0 %v478
        %v767 = vpop.f32.mrb[0].mxu0
        %v768 = vadd.f32 0.0, %v767
        %v769 = vpop.f32.mrb[0].mxu0
        %770 = vmatprep.mubr.f32.mxu0 0.0
        %771 = vmatmul.mubr.f32.gmra.mrb[0].mxu0 %v481
        %v772 = vpop.f32.mrb[0].mxu0
        %v773 = vadd.f32 0.0, %v772
        %v774 = vpop.f32.mrb[0].mxu0
        %775 = vmatprep.mubr.f32.mxu0 0.0
        %776 = vmatmul.mubr.f32.gmra.mrb[0].mxu0 %v484
        %v777 = vpop.f32.mrb[0].mxu0
        %v778 = vadd.f32 0.0, %v777
        %v779 = vpop.f32.mrb[0].mxu0
        %780 = vmatprep.mubr.f32.mxu0 0.0
        %781 = vmatmul.mubr.f32.gmra.mrb[0].mxu0 %v487
        %v782 = vpop.f32.mrb[0].mxu0
        %v783 = vadd.f32 0.0, %v782
        %v784 = vpop.f32.mrb[0].mxu0
        %785 = vmatprep.mubr.f32.mxu0 0.0
        %786 = vmatmul.mubr.f32.gmra.mrb[0].mxu0 %v490
        %v787 = vpop.f32.mrb[0].mxu0
        %v788 = vadd.f32 0.0, %v787
        %v789 = vpop.f32.mrb[0].mxu0
        %790 = vmatprep.mubr.f32.mxu0 0.0
        %791 = vmatmul.mubr.f32.gmra.mrb[0].mxu0 %v493
        %v792 = vpop.f32.mrb[0].mxu0
        %v793 = vadd.f32 0.0, %v792
        %v794 = vpop.f32.mrb[0].mxu0
        %795 = vmatprep.mubr.f32.mxu0 0.0
        %796 = vmatmul.mubr.f32.gmra.mrb[0].mxu0 %v496
        %v797 = vpop.f32.mrb[0].mxu0
        %v798 = vadd.f32 0.0, %v797
        %v799 = vpop.f32.mrb[0].mxu0
        %800 = vmatprep.mubr.f32.mxu0 0.0
        %801 = vmatmul.mubr.f32.gmra.mrb[0].mxu0 %v499
        %v802 = vpop.f32.mrb[0].mxu0
        %v803 = vadd.f32 0.0, %v802
        %v804 = vpop.f32.mrb[0].mxu0
        %805 = vmatprep.mubr.f32.mxu0 0.0
        %806 = vmatmul.mubr.f32.gmra.mrb[0].mxu0 %v502
        %v807 = vpop.f32.mrb[0].mxu0
        %v808 = vadd.f32 0.0, %v807
        %v809 = vpop.f32.mrb[0].mxu0
        %810 = vmatprep.mubr.f32.mxu0 0.0
        %811 = vmatmul.mubr.f32.gmra.mrb[0].mxu0 %v505
        %v812 = vpop.f32.mrb[0].mxu0
        %v813 = vadd.f32 0.0, %v812
        %v814 = vpop.f32.mrb[0].mxu0
        %815 = vmatprep.mubr.f32.mxu0 0.0
        %816 = vmatmul.mubr.f32.gmra.mrb[0].mxu0 %v508
        %v817 = vpop.f32.mrb[0].mxu0
        %v818 = vadd.f32 0.0, %v817
        %v819 = vpop.f32.mrb[0].mxu0
        %820 = vmatprep.mubr.f32.mxu0 0.0
        %821 = vmatmul.mubr.f32.gmra.mrb[0].mxu0 %v511
        %v822 = vpop.f32.mrb[0].mxu0
        %v823 = vadd.f32 0.0, %v822
        %v824 = vpop.f32.mrb[0].mxu0
        %825 = vmatprep.mubr.f32.mxu0 0.0
        %826 = vmatmul.mubr.f32.gmra.mrb[0].mxu0 %v514
        %v827 = vpop.f32.mrb[0].mxu0
        %v828 = vadd.f32 0.0, %v827
        %v829 = vpop.f32.mrb[0].mxu0
        %830 = vmatprep.mubr.f32.mxu0 0.0
        %831 = vmatmul.mubr.f32.gmra.mrb[0].mxu0 %v517
        %v832 = vpop.f32.mrb[0].mxu0
        %v833 = vadd.f32 0.0, %v832
        %v834 = vpop.f32.mrb[0].mxu0
        %835 = vmatprep.mubr.f32.mxu0 0.0
        %836 = vmatmul.mubr.f32.gmra.mrb[0].mxu0 %v520
        %v837 = vpop.f32.mrb[0].mxu0
        %v838 = vadd.f32 0.0, %v837
        %v839 = vpop.f32.mrb[0].mxu0
        %840 = vmatprep.mubr.f32.mxu0 0.0
        %841 = vmatmul.mubr.f32.gmra.mrb[0].mxu0 %v523
        %v842 = vpop.f32.mrb[0].mxu0
        %v843 = vadd.f32 0.0, %v842
        %v844 = vpop.f32.mrb[0].mxu0
        %845 = vmatprep.mubr.f32.mxu0 0.0
        %846 = vmatmul.mubr.f32.gmra.mrb[0].mxu0 %v526
        %v847 = vpop.f32.mrb[0].mxu0
        %v848 = vadd.f32 0.0, %v847
        %v849 = vpop.f32.mrb[0].mxu0
        %850 = vmatprep.mubr.f32.mxu0 0.0
        %851 = vmatmul.mubr.f32.gmra.mrb[0].mxu0 %v529
        %v852 = vpop.f32.mrb[0].mxu0
        %v853 = vadd.f32 0.0, %v852
        %v854 = vpop.f32.mrb[0].mxu0
        %855 = vmatprep.mubr.f32.mxu0 0.0
        %856 = vmatmul.mubr.f32.gmra.mrb[0].mxu0 %v532
        %v857 = vpop.f32.mrb[0].mxu0
        %v858 = vadd.f32 0.0, %v857
        %v859 = vpop.f32.mrb[0].mxu0
        %860 = vmatprep.mubr.f32.mxu0 0.0
        %861 = vmatmul.mubr.f32.gmra.mrb[0].mxu0 %v535
        %v862 = vpop.f32.mrb[0].mxu0
        %v863 = vadd.f32 0.0, %v862
        %v864 = vpop.f32.mrb[0].mxu0
        %865 = vmatprep.mubr.f32.mxu0 0.0
        %866 = vmatmul.mubr.f32.gmra.mrb[0].mxu0 %v538
        %v867 = vpop.f32.mrb[0].mxu0
        %v868 = vadd.f32 0.0, %v867
        %v869 = vpop.f32.mrb[0].mxu0
        %870 = vmatprep.mubr.f32.mxu0 0.0
        %871 = vmatmul.mubr.f32.gmra.mrb[0].mxu0 %v541
        %v872 = vpop.f32.mrb[0].mxu0
        %v873 = vadd.f32 0.0, %v872
        %v874 = vpop.f32.mrb[0].mxu0
        %875 = vmatprep.mubr.f32.mxu0 0.0
        %876 = vmatmul.mubr.f32.gmra.mrb[0].mxu0 %v544
        %v877 = vpop.f32.mrb[0].mxu0
        %v878 = vadd.f32 0.0, %v877
        %v879 = vpop.f32.mrb[0].mxu0
        %880 = vmatprep.mubr.f32.mxu0 0.0
        %881 = vmatmul.mubr.f32.gmra.mrb[0].mxu0 %v547
        %v882 = vpop.f32.mrb[0].mxu0
        %v883 = vadd.f32 0.0, %v882
        %v884 = vpop.f32.mrb[0].mxu0
        %885 = vmatprep.mubr.f32.mxu0 0.0
        %886 = vmatmul.mubr.f32.gmra.mrb[0].mxu0 %v550
        %v887 = vpop.f32.mrb[0].mxu0
        %v888 = vadd.f32 0.0, %v887
        %v889 = vpop.f32.mrb[0].mxu0
        %890 = vmatprep.mubr.f32.mxu0 0.0
        %891 = vmatmul.mubr.f32.gmra.mrb[0].mxu0 %v553
        %v892 = vpop.f32.mrb[0].mxu0
        %v893 = vadd.f32 0.0, %v892
        %v894 = vpop.f32.mrb[0].mxu0
        %895 = vmatprep.mubr.f32.mxu0 0.0
        %896 = vmatmul.mubr.f32.gmra.mrb[0].mxu0 %v556
        %v897 = vpop.f32.mrb[0].mxu0
        %v898 = vadd.f32 0.0, %v897
        %v899 = vpop.f32.mrb[0].mxu0
        %900 = vmatprep.mubr.f32.mxu0 0.0
        %901 = vmatmul.mubr.f32.gmra.mrb[0].mxu0 %v559
        %v902 = vpop.f32.mrb[0].mxu0
        %v903 = vadd.f32 0.0, %v902
        %v904 = vpop.f32.mrb[0].mxu0
        %905 = vmatprep.mubr.f32.mxu0 0.0
        %906 = vmatmul.mubr.f32.gmra.mrb[0].mxu0 %v562
        %v907 = vpop.f32.mrb[0].mxu0
        %v908 = vadd.f32 0.0, %v907
        %v909 = vpop.f32.mrb[0].mxu0
        %910 = vmatprep.mubr.f32.mxu0 0.0
        %911 = vmatmul.mubr.f32.gmra.mrb[0].mxu0 %v565
        %v912 = vpop.f32.mrb[0].mxu0
        %v913 = vadd.f32 0.0, %v912
        %v914 = vpop.f32.mrb[0].mxu0
        %915 = vmatprep.mubr.f32.mxu0 0.0
        %916 = vmatmul.mubr.f32.gmra.mrb[0].mxu0 %v568
        %v917 = vpop.f32.mrb[0].mxu0
        %v918 = vadd.f32 0.0, %v917
        %v919 = vpop.f32.mrb[0].mxu0
        %920 = vmatprep.mubr.f32.mxu0 0.0
        %921 = vmatmul.mubr.f32.gmra.mrb[0].mxu0 %v571
        %v922 = vpop.f32.mrb[0].mxu0
        %v923 = vadd.f32 0.0, %v922
        %v924 = vpop.f32.mrb[0].mxu0
        %925 = vmatprep.mubr.f32.mxu0 0.0
        %926 = vmatmul.mubr.f32.gmra.mrb[0].mxu0 %v574
        %v927 = vpop.f32.mrb[0].mxu0
        %v928 = vadd.f32 0.0, %v927
        %v929 = vpop.f32.mrb[0].mxu0
        %930 = vmatprep.mubr.f32.mxu0 0.0
        %931 = vmatmul.mubr.f32.gmra.mrb[0].mxu0 %v577
        %v932 = vpop.f32.mrb[0].mxu0
        %v933 = vadd.f32 0.0, %v932
        %v934 = vpop.f32.mrb[0].mxu0
        %935 = vmatprep.mubr.f32.mxu0 0.0
        %936 = vmatmul.mubr.f32.gmra.mrb[0].mxu0 %v580
        %v937 = vpop.f32.mrb[0].mxu0
        %v938 = vadd.f32 0.0, %v937
        %v939 = vpop.f32.mrb[0].mxu0
        %940 = vmatprep.mubr.f32.mxu0 0.0
        %941 = vmatmul.mubr.f32.gmra.mrb[0].mxu0 %v583
        %v942 = vpop.f32.mrb[0].mxu0
        %v943 = vadd.f32 0.0, %v942
        %v944 = vpop.f32.mrb[0].mxu0
        %945 = vmatprep.mubr.f32.mxu0 0.0
        %946 = vmatmul.mubr.f32.gmra.mrb[0].mxu0 %v586
        %v947 = vpop.f32.mrb[0].mxu0
        %v948 = vadd.f32 0.0, %v947
        %v949 = vpop.f32.mrb[0].mxu0
        %950 = vmatprep.mubr.f32.mxu0 0.0
        %951 = vmatmul.mubr.f32.gmra.mrb[0].mxu0 %v589
        %v952 = vpop.f32.mrb[0].mxu0
        %v953 = vadd.f32 0.0, %v952
        %v954 = vpop.f32.mrb[0].mxu0
        %955 = vmatprep.mubr.f32.mxu0 0.0
        %956 = vmatmul.mubr.f32.gmra.mrb[0].mxu0 %v592
        %v957 = vpop.f32.mrb[0].mxu0
        %v958 = vadd.f32 0.0, %v957
        %v959 = vpop.f32.mrb[0].mxu0
        %960 = vmatprep.mubr.f32.mxu0 0.0
        %961 = vmatmul.mubr.f32.gmra.mrb[0].mxu0 %v595
        %v962 = vpop.f32.mrb[0].mxu0
        %v963 = vadd.f32 0.0, %v962
        %v964 = vpop.f32.mrb[0].mxu0
        %965 = vmatprep.mubr.f32.mxu0 0.0
        %966 = vmatmul.mubr.f32.gmra.mrb[0].mxu0 %v598
        %v967 = vpop.f32.mrb[0].mxu0
        %v968 = vadd.f32 0.0, %v967
        %v969 = vpop.f32.mrb[0].mxu0
        %970 = vmatprep.mubr.f32.mxu0 0.0
        %971 = vmatmul.mubr.f32.gmra.mrb[0].mxu0 %v601
        %v972 = vpop.f32.mrb[0].mxu0
        %v973 = vadd.f32 0.0, %v972
        %v974 = vpop.f32.mrb[0].mxu0
        %975 = vmatprep.mubr.f32.mxu0 0.0
        %976 = vmatmul.mubr.f32.gmra.mrb[0].mxu0 %v604
        %v977 = vpop.f32.mrb[0].mxu0
        %v978 = vadd.f32 0.0, %v977
        %v979 = vpop.f32.mrb[0].mxu0
        %980 = vmatprep.mubr.f32.mxu0 0.0
        %981 = vmatmul.mubr.f32.gmra.mrb[0].mxu0 %v607
        %v982 = vpop.f32.mrb[0].mxu0
        %v983 = vadd.f32 0.0, %v982
        %v984 = vpop.f32.mrb[0].mxu0
        %985 = vmatprep.mubr.f32.mxu0 0.0
        %986 = vmatmul.mubr.f32.gmra.mrb[0].mxu0 %v610
        %v987 = vpop.f32.mrb[0].mxu0
        %v988 = vadd.f32 0.0, %v987
        %v989 = vpop.f32.mrb[0].mxu0
        %990 = vmatprep.mubr.f32.mxu0 0.0
        %991 = vmatmul.mubr.f32.gmra.mrb[0].mxu0 %v613
        %v992 = vpop.f32.mrb[0].mxu0
        %v993 = vadd.f32 0.0, %v992
        %v994 = vpop.f32.mrb[0].mxu0
        %995 = vmatprep.mubr.f32.mxu0 0.0
        %996 = vmatmul.mubr.f32.gmra.mrb[0].mxu0 %v616
        %v997 = vpop.f32.mrb[0].mxu0
        %v998 = vadd.f32 0.0, %v997
        %v999 = vpop.f32.mrb[0].mxu0
        %1000 = vmatprep.mubr.f32.mxu0 0.0
        %1001 = vmatmul.mubr.f32.gmra.mrb[0].mxu0 %v619
        %v1002 = vpop.f32.mrb[0].mxu0
        %v1003 = vadd.f32 0.0, %v1002
        %v1004 = vpop.f32.mrb[0].mxu0
        %1005 = vmatprep.mubr.f32.mxu0 0.0
        %1006 = vmatmul.mubr.f32.gmra.mrb[0].mxu0 %v622
        %v1007 = vpop.f32.mrb[0].mxu0
        %v1008 = vadd.f32 0.0, %v1007
        %v1009 = vpop.f32.mrb[0].mxu0
        %1010 = vmatprep.mubr.f32.mxu0 0.0
        %1011 = vmatmul.mubr.f32.gmra.mrb[0].mxu0 %v625
        %v1012 = vpop.f32.mrb[0].mxu0
        %v1013 = vadd.f32 0.0, %v1012
        %v1014 = vpop.f32.mrb[0].mxu0
        %1015 = vdwg.mxu0
        %vm1016 = vcmask 89088
        %v1018 = vsel %vm1016, %v303, 0
        %v1021 = vsel %vm1016, %v304, 0
        %v1024 = vsel %vm1016, %v305, 0
        %v1027 = vsel %vm1016, %v306, 0
        %v1030 = vsel %vm1016, %v307, 0
        %v1033 = vsel %vm1016, %v308, 0
        %v1036 = vsel %vm1016, %v309, 0
        %v1039 = vsel %vm1016, %v310, 0
        %v1042 = vsel %vm1016, %v311, 0
        %v1045 = vsel %vm1016, %v312, 0
        %v1048 = vsel %vm1016, %v313, 0
        %v1051 = vsel %vm1016, %v314, 0
        %v1054 = vsel %vm1016, %v315, 0
        %v1057 = vsel %vm1016, %v316, 0
        %v1060 = vsel %vm1016, %v317, 0
        %v1063 = vsel %vm1016, %v318, 0
        %v1066 = vsel %vm1016, %v319, 0
        %v1069 = vsel %vm1016, %v320, 0
        %v1072 = vsel %vm1016, %v321, 0
        %v1075 = vsel %vm1016, %v322, 0
        %v1078 = vsel %vm1016, %v323, 0
        %v1081 = vsel %vm1016, %v324, 0
        %v1084 = vsel %vm1016, %v325, 0
        %v1087 = vsel %vm1016, %v326, 0
        %v1090 = vsel %vm1016, %v327, 0
        %v1093 = vsel %vm1016, %v328, 0
        %v1096 = vsel %vm1016, %v329, 0
        %v1099 = vsel %vm1016, %v330, 0
        %v1102 = vsel %vm1016, %v331, 0
        %v1105 = vsel %vm1016, %v332, 0
        %v1108 = vsel %vm1016, %v333, 0
        %v1111 = vsel %vm1016, %v334, 0
        %v1114 = vsel %vm1016, %v335, 0
        %v1117 = vsel %vm1016, %v336, 0
        %v1120 = vsel %vm1016, %v337, 0
        %v1123 = vsel %vm1016, %v338, 0
        %v1126 = vsel %vm1016, %v339, 0
        %v1129 = vsel %vm1016, %v340, 0
        %v1132 = vsel %vm1016, %v341, 0
        %v1135 = vsel %vm1016, %v342, 0
        %v1138 = vsel %vm1016, %v343, 0
        %v1141 = vsel %vm1016, %v344, 0
        %v1144 = vsel %vm1016, %v345, 0
        %v1147 = vsel %vm1016, %v346, 0
        %v1150 = vsel %vm1016, %v347, 0
        %v1153 = vsel %vm1016, %v348, 0
        %v1156 = vsel %vm1016, %v349, 0
        %v1159 = vsel %vm1016, %v350, 0
        %v1162 = vsel %vm1016, %v351, 0
        %v1165 = vsel %vm1016, %v352, 0
        %v1168 = vsel %vm1016, %v353, 0
        %v1171 = vsel %vm1016, %v354, 0
        %v1174 = vsel %vm1016, %v355, 0
        %v1177 = vsel %vm1016, %v356, 0
        %v1180 = vsel %vm1016, %v357, 0
        %v1183 = vsel %vm1016, %v358, 0
        %v1186 = vsel %vm1016, %v359, 0
        %v1189 = vsel %vm1016, %v360, 0
        %v1192 = vsel %vm1016, %v361, 0
        %v1195 = vsel %vm1016, %v362, 0
        %v1198 = vsel %vm1016, %v363, 0
        %v1201 = vsel %vm1016, %v364, 0
        %v1204 = vsel %vm1016, %v365, 0
        %v1207 = vsel %vm1016, %v366, 0
        %v1210 = vsel %vm627, %v368, 0
        %1212 = vmatprep.subr.mxu0 0.0
        %1213 = vmatpush1.msra.mxu0 %v367
        %1214 = vmatprep.subr.mxu0 0.0
        %1215 = vmatpush1.msra.mxu0 %v1210
        %1216 = vmatprep.subr.mxu0 0.0
        %1217 = vmatpush1.msra.mxu0 0.0
        %1218 = vmatprep.subr.mxu0 0.0
        %1219 = vmatpush1.msra.mxu0 0.0
        %1220 = vmatprep.subr.mxu0 0.0
        %1221 = vmatpush1.msra.mxu0 0.0
        %1222 = vmatprep.subr.mxu0 0.0
        %1223 = vmatpush1.msra.mxu0 0.0
        %1224 = vmatprep.subr.mxu0 0.0
        %1225 = vmatpush1.msra.mxu0 0.0
        %1226 = vmatprep.subr.mxu0 0.0
        %1227 = vmatpush1.msra.mxu0 0.0
        %1228 = vmatprep.subr.mxu0 0.0
        %1229 = vmatpush1.msra.mxu0 0.0
        %1230 = vmatprep.subr.mxu0 0.0
        %1231 = vmatpush1.msra.mxu0 0.0
        %1232 = vmatprep.subr.mxu0 0.0
        %1233 = vmatpush1.msra.mxu0 0.0
        %1234 = vmatprep.subr.mxu0 0.0
        %1235 = vmatpush1.msra.mxu0 0.0
        %1236 = vmatprep.subr.mxu0 0.0
        %1237 = vmatpush1.msra.mxu0 0.0
        %1238 = vmatprep.subr.mxu0 0.0
        %1239 = vmatpush1.msra.mxu0 0.0
        %1240 = vmatprep.subr.mxu0 0.0
        %1241 = vmatpush1.msra.mxu0 0.0
        %1242 = vmatprep.subr.mxu0 0.0
        %1243 = vmatpush1.msra.mxu0 0.0
        %1244 = vmatprep.subr.mxu0 0.0
        %1245 = vmatpush1.msra.mxu0 0.0
        %1246 = vmatprep.subr.mxu0 0.0
        %1247 = vmatpush1.msra.mxu0 0.0
        %1248 = vmatprep.subr.mxu0 0.0
        %1249 = vmatpush1.msra.mxu0 0.0
        %1250 = vmatprep.subr.mxu0 0.0
        %1251 = vmatpush1.msra.mxu0 0.0
        %1252 = vmatprep.subr.mxu0 0.0
        %1253 = vmatpush1.msra.mxu0 0.0
        %1254 = vmatprep.subr.mxu0 0.0
        %1255 = vmatpush1.msra.mxu0 0.0
        %1256 = vmatprep.subr.mxu0 0.0
        %1257 = vmatpush1.msra.mxu0 0.0
        %1258 = vmatprep.subr.mxu0 0.0
        %1259 = vmatpush1.msra.mxu0 0.0
        %1260 = vmatprep.subr.mxu0 0.0
        %1261 = vmatpush1.msra.mxu0 0.0
        %1262 = vmatprep.subr.mxu0 0.0
        %1263 = vmatpush1.msra.mxu0 0.0
        %1264 = vmatprep.subr.mxu0 0.0
        %1265 = vmatpush1.msra.mxu0 0.0
        %1266 = vmatprep.subr.mxu0 0.0
        %1267 = vmatpush1.msra.mxu0 0.0
        %1268 = vmatprep.subr.mxu0 0.0
        %1269 = vmatpush1.msra.mxu0 0.0
        %1270 = vmatprep.subr.mxu0 0.0
        %1271 = vmatpush1.msra.mxu0 0.0
        %1272 = vmatprep.subr.mxu0 0.0
        %1273 = vmatpush1.msra.mxu0 0.0
        %1274 = vmatprep.subr.mxu0 0.0
        %1275 = vmatpush1.msra.mxu0 0.0
        %1276 = vmatprep.mubr.f32.mxu0 0.0
        %1277 = vmatmul.mubr.f32.gmra.mrb[0].mxu0 %v1018
        %v1278 = vpop.f32.mrb[0].mxu0
        %v1279 = vadd.f32 %v698, %v1278
        %v1280 = vpop.f32.mrb[0].mxu0
        %1281 = vmatprep.mubr.f32.mxu0 0.0
        %1282 = vmatmul.mubr.f32.gmra.mrb[0].mxu0 %v1021
        %v1283 = vpop.f32.mrb[0].mxu0
        %v1284 = vadd.f32 %v703, %v1283
        %v1285 = vpop.f32.mrb[0].mxu0
        %1286 = vmatprep.mubr.f32.mxu0 0.0
        %1287 = vmatmul.mubr.f32.gmra.mrb[0].mxu0 %v1024
        %v1288 = vpop.f32.mrb[0].mxu0
        %v1289 = vadd.f32 %v708, %v1288
        %v1290 = vpop.f32.mrb[0].mxu0
        %1291 = vmatprep.mubr.f32.mxu0 0.0
        %1292 = vmatmul.mubr.f32.gmra.mrb[0].mxu0 %v1027
        %v1293 = vpop.f32.mrb[0].mxu0
        %v1294 = vadd.f32 %v713, %v1293
        %v1295 = vpop.f32.mrb[0].mxu0
        %1296 = vmatprep.mubr.f32.mxu0 0.0
        %1297 = vmatmul.mubr.f32.gmra.mrb[0].mxu0 %v1030
        %v1298 = vpop.f32.mrb[0].mxu0
        %v1299 = vadd.f32 %v718, %v1298
        %v1300 = vpop.f32.mrb[0].mxu0
        %1301 = vmatprep.mubr.f32.mxu0 0.0
        %1302 = vmatmul.mubr.f32.gmra.mrb[0].mxu0 %v1033
        %v1303 = vpop.f32.mrb[0].mxu0
        %v1304 = vadd.f32 %v723, %v1303
        %v1305 = vpop.f32.mrb[0].mxu0
        %1306 = vmatprep.mubr.f32.mxu0 0.0
        %1307 = vmatmul.mubr.f32.gmra.mrb[0].mxu0 %v1036
        %v1308 = vpop.f32.mrb[0].mxu0
        %v1309 = vadd.f32 %v728, %v1308
        %v1310 = vpop.f32.mrb[0].mxu0
        %1311 = vmatprep.mubr.f32.mxu0 0.0
        %1312 = vmatmul.mubr.f32.gmra.mrb[0].mxu0 %v1039
        %v1313 = vpop.f32.mrb[0].mxu0
        %v1314 = vadd.f32 %v733, %v1313
        %v1315 = vpop.f32.mrb[0].mxu0
        %1316 = vmatprep.mubr.f32.mxu0 0.0
        %1317 = vmatmul.mubr.f32.gmra.mrb[0].mxu0 %v1042
        %v1318 = vpop.f32.mrb[0].mxu0
        %v1319 = vadd.f32 %v738, %v1318
        %v1320 = vpop.f32.mrb[0].mxu0
        %1321 = vmatprep.mubr.f32.mxu0 0.0
        %1322 = vmatmul.mubr.f32.gmra.mrb[0].mxu0 %v1045
        %v1323 = vpop.f32.mrb[0].mxu0
        %v1324 = vadd.f32 %v743, %v1323
        %v1325 = vpop.f32.mrb[0].mxu0
        %1326 = vmatprep.mubr.f32.mxu0 0.0
        %1327 = vmatmul.mubr.f32.gmra.mrb[0].mxu0 %v1048
        %v1328 = vpop.f32.mrb[0].mxu0
        %v1329 = vadd.f32 %v748, %v1328
        %v1330 = vpop.f32.mrb[0].mxu0
        %1331 = vmatprep.mubr.f32.mxu0 0.0
        %1332 = vmatmul.mubr.f32.gmra.mrb[0].mxu0 %v1051
        %v1333 = vpop.f32.mrb[0].mxu0
        %v1334 = vadd.f32 %v753, %v1333
        %v1335 = vpop.f32.mrb[0].mxu0
        %1336 = vmatprep.mubr.f32.mxu0 0.0
        %1337 = vmatmul.mubr.f32.gmra.mrb[0].mxu0 %v1054
        %v1338 = vpop.f32.mrb[0].mxu0
        %v1339 = vadd.f32 %v758, %v1338
        %v1340 = vpop.f32.mrb[0].mxu0
        %1341 = vmatprep.mubr.f32.mxu0 0.0
        %1342 = vmatmul.mubr.f32.gmra.mrb[0].mxu0 %v1057
        %v1343 = vpop.f32.mrb[0].mxu0
        %v1344 = vadd.f32 %v763, %v1343
        %v1345 = vpop.f32.mrb[0].mxu0
        %1346 = vmatprep.mubr.f32.mxu0 0.0
        %1347 = vmatmul.mubr.f32.gmra.mrb[0].mxu0 %v1060
        %v1348 = vpop.f32.mrb[0].mxu0
        %v1349 = vadd.f32 %v768, %v1348
        %v1350 = vpop.f32.mrb[0].mxu0
        %1351 = vmatprep.mubr.f32.mxu0 0.0
        %1352 = vmatmul.mubr.f32.gmra.mrb[0].mxu0 %v1063
        %v1353 = vpop.f32.mrb[0].mxu0
        %v1354 = vadd.f32 %v773, %v1353
        %v1355 = vpop.f32.mrb[0].mxu0
        %1356 = vmatprep.mubr.f32.mxu0 0.0
        %1357 = vmatmul.mubr.f32.gmra.mrb[0].mxu0 %v1066
        %v1358 = vpop.f32.mrb[0].mxu0
        %v1359 = vadd.f32 %v778, %v1358
        %v1360 = vpop.f32.mrb[0].mxu0
        %1361 = vmatprep.mubr.f32.mxu0 0.0
        %1362 = vmatmul.mubr.f32.gmra.mrb[0].mxu0 %v1069
        %v1363 = vpop.f32.mrb[0].mxu0
        %v1364 = vadd.f32 %v783, %v1363
        %v1365 = vpop.f32.mrb[0].mxu0
        %1366 = vmatprep.mubr.f32.mxu0 0.0
        %1367 = vmatmul.mubr.f32.gmra.mrb[0].mxu0 %v1072
        %v1368 = vpop.f32.mrb[0].mxu0
        %v1369 = vadd.f32 %v788, %v1368
        %v1370 = vpop.f32.mrb[0].mxu0
        %1371 = vmatprep.mubr.f32.mxu0 0.0
        %1372 = vmatmul.mubr.f32.gmra.mrb[0].mxu0 %v1075
        %v1373 = vpop.f32.mrb[0].mxu0
        %v1374 = vadd.f32 %v793, %v1373
        %v1375 = vpop.f32.mrb[0].mxu0
        %1376 = vmatprep.mubr.f32.mxu0 0.0
        %1377 = vmatmul.mubr.f32.gmra.mrb[0].mxu0 %v1078
        %v1378 = vpop.f32.mrb[0].mxu0
        %v1379 = vadd.f32 %v798, %v1378
        %v1380 = vpop.f32.mrb[0].mxu0
        %1381 = vmatprep.mubr.f32.mxu0 0.0
        %1382 = vmatmul.mubr.f32.gmra.mrb[0].mxu0 %v1081
        %v1383 = vpop.f32.mrb[0].mxu0
        %v1384 = vadd.f32 %v803, %v1383
        %v1385 = vpop.f32.mrb[0].mxu0
        %1386 = vmatprep.mubr.f32.mxu0 0.0
        %1387 = vmatmul.mubr.f32.gmra.mrb[0].mxu0 %v1084
        %v1388 = vpop.f32.mrb[0].mxu0
        %v1389 = vadd.f32 %v808, %v1388
        %v1390 = vpop.f32.mrb[0].mxu0
        %1391 = vmatprep.mubr.f32.mxu0 0.0
        %1392 = vmatmul.mubr.f32.gmra.mrb[0].mxu0 %v1087
        %v1393 = vpop.f32.mrb[0].mxu0
        %v1394 = vadd.f32 %v813, %v1393
        %v1395 = vpop.f32.mrb[0].mxu0
        %1396 = vmatprep.mubr.f32.mxu0 0.0
        %1397 = vmatmul.mubr.f32.gmra.mrb[0].mxu0 %v1090
        %v1398 = vpop.f32.mrb[0].mxu0
        %v1399 = vadd.f32 %v818, %v1398
        %v1400 = vpop.f32.mrb[0].mxu0
        %1401 = vmatprep.mubr.f32.mxu0 0.0
        %1402 = vmatmul.mubr.f32.gmra.mrb[0].mxu0 %v1093
        %v1403 = vpop.f32.mrb[0].mxu0
        %v1404 = vadd.f32 %v823, %v1403
        %v1405 = vpop.f32.mrb[0].mxu0
        %1406 = vmatprep.mubr.f32.mxu0 0.0
        %1407 = vmatmul.mubr.f32.gmra.mrb[0].mxu0 %v1096
        %v1408 = vpop.f32.mrb[0].mxu0
        %v1409 = vadd.f32 %v828, %v1408
        %v1410 = vpop.f32.mrb[0].mxu0
        %1411 = vmatprep.mubr.f32.mxu0 0.0
        %1412 = vmatmul.mubr.f32.gmra.mrb[0].mxu0 %v1099
        %v1413 = vpop.f32.mrb[0].mxu0
        %v1414 = vadd.f32 %v833, %v1413
        %v1415 = vpop.f32.mrb[0].mxu0
        %1416 = vmatprep.mubr.f32.mxu0 0.0
        %1417 = vmatmul.mubr.f32.gmra.mrb[0].mxu0 %v1102
        %v1418 = vpop.f32.mrb[0].mxu0
        %v1419 = vadd.f32 %v838, %v1418
        %v1420 = vpop.f32.mrb[0].mxu0
        %1421 = vmatprep.mubr.f32.mxu0 0.0
        %1422 = vmatmul.mubr.f32.gmra.mrb[0].mxu0 %v1105
        %v1423 = vpop.f32.mrb[0].mxu0
        %v1424 = vadd.f32 %v843, %v1423
        %v1425 = vpop.f32.mrb[0].mxu0
        %1426 = vmatprep.mubr.f32.mxu0 0.0
        %1427 = vmatmul.mubr.f32.gmra.mrb[0].mxu0 %v1108
        %v1428 = vpop.f32.mrb[0].mxu0
        %v1429 = vadd.f32 %v848, %v1428
        %v1430 = vpop.f32.mrb[0].mxu0
        %1431 = vmatprep.mubr.f32.mxu0 0.0
        %1432 = vmatmul.mubr.f32.gmra.mrb[0].mxu0 %v1111
        %v1433 = vpop.f32.mrb[0].mxu0
        %v1434 = vadd.f32 %v853, %v1433
        %v1435 = vpop.f32.mrb[0].mxu0
        %1436 = vmatprep.mubr.f32.mxu0 0.0
        %1437 = vmatmul.mubr.f32.gmra.mrb[0].mxu0 %v1114
        %v1438 = vpop.f32.mrb[0].mxu0
        %v1439 = vadd.f32 %v858, %v1438
        %v1440 = vpop.f32.mrb[0].mxu0
        %1441 = vmatprep.mubr.f32.mxu0 0.0
        %1442 = vmatmul.mubr.f32.gmra.mrb[0].mxu0 %v1117
        %v1443 = vpop.f32.mrb[0].mxu0
        %v1444 = vadd.f32 %v863, %v1443
        %v1445 = vpop.f32.mrb[0].mxu0
        %1446 = vmatprep.mubr.f32.mxu0 0.0
        %1447 = vmatmul.mubr.f32.gmra.mrb[0].mxu0 %v1120
        %v1448 = vpop.f32.mrb[0].mxu0
        %v1449 = vadd.f32 %v868, %v1448
        %v1450 = vpop.f32.mrb[0].mxu0
        %1451 = vmatprep.mubr.f32.mxu0 0.0
        %1452 = vmatmul.mubr.f32.gmra.mrb[0].mxu0 %v1123
        %v1453 = vpop.f32.mrb[0].mxu0
        %v1454 = vadd.f32 %v873, %v1453
        %v1455 = vpop.f32.mrb[0].mxu0
        %1456 = vmatprep.mubr.f32.mxu0 0.0
        %1457 = vmatmul.mubr.f32.gmra.mrb[0].mxu0 %v1126
        %v1458 = vpop.f32.mrb[0].mxu0
        %v1459 = vadd.f32 %v878, %v1458
        %v1460 = vpop.f32.mrb[0].mxu0
        %1461 = vmatprep.mubr.f32.mxu0 0.0
        %1462 = vmatmul.mubr.f32.gmra.mrb[0].mxu0 %v1129
        %v1463 = vpop.f32.mrb[0].mxu0
        %v1464 = vadd.f32 %v883, %v1463
        %v1465 = vpop.f32.mrb[0].mxu0
        %1466 = vmatprep.mubr.f32.mxu0 0.0
        %1467 = vmatmul.mubr.f32.gmra.mrb[0].mxu0 %v1132
        %v1468 = vpop.f32.mrb[0].mxu0
        %v1469 = vadd.f32 %v888, %v1468
        %v1470 = vpop.f32.mrb[0].mxu0
        %1471 = vmatprep.mubr.f32.mxu0 0.0
        %1472 = vmatmul.mubr.f32.gmra.mrb[0].mxu0 %v1135
        %v1473 = vpop.f32.mrb[0].mxu0
        %v1474 = vadd.f32 %v893, %v1473
        %v1475 = vpop.f32.mrb[0].mxu0
        %1476 = vmatprep.mubr.f32.mxu0 0.0
        %1477 = vmatmul.mubr.f32.gmra.mrb[0].mxu0 %v1138
        %v1478 = vpop.f32.mrb[0].mxu0
        %v1479 = vadd.f32 %v898, %v1478
        %v1480 = vpop.f32.mrb[0].mxu0
        %1481 = vmatprep.mubr.f32.mxu0 0.0
        %1482 = vmatmul.mubr.f32.gmra.mrb[0].mxu0 %v1141
        %v1483 = vpop.f32.mrb[0].mxu0
        %v1484 = vadd.f32 %v903, %v1483
        %v1485 = vpop.f32.mrb[0].mxu0
        %1486 = vmatprep.mubr.f32.mxu0 0.0
        %1487 = vmatmul.mubr.f32.gmra.mrb[0].mxu0 %v1144
        %v1488 = vpop.f32.mrb[0].mxu0
        %v1489 = vadd.f32 %v908, %v1488
        %v1490 = vpop.f32.mrb[0].mxu0
        %1491 = vmatprep.mubr.f32.mxu0 0.0
        %1492 = vmatmul.mubr.f32.gmra.mrb[0].mxu0 %v1147
        %v1493 = vpop.f32.mrb[0].mxu0
        %v1494 = vadd.f32 %v913, %v1493
        %v1495 = vpop.f32.mrb[0].mxu0
        %1496 = vmatprep.mubr.f32.mxu0 0.0
        %1497 = vmatmul.mubr.f32.gmra.mrb[0].mxu0 %v1150
        %v1498 = vpop.f32.mrb[0].mxu0
        %v1499 = vadd.f32 %v918, %v1498
        %v1500 = vpop.f32.mrb[0].mxu0
        %1501 = vmatprep.mubr.f32.mxu0 0.0
        %1502 = vmatmul.mubr.f32.gmra.mrb[0].mxu0 %v1153
        %v1503 = vpop.f32.mrb[0].mxu0
        %v1504 = vadd.f32 %v923, %v1503
        %v1505 = vpop.f32.mrb[0].mxu0
        %1506 = vmatprep.mubr.f32.mxu0 0.0
        %1507 = vmatmul.mubr.f32.gmra.mrb[0].mxu0 %v1156
        %v1508 = vpop.f32.mrb[0].mxu0
        %v1509 = vadd.f32 %v928, %v1508
        %v1510 = vpop.f32.mrb[0].mxu0
        %1511 = vmatprep.mubr.f32.mxu0 0.0
        %1512 = vmatmul.mubr.f32.gmra.mrb[0].mxu0 %v1159
        %v1513 = vpop.f32.mrb[0].mxu0
        %v1514 = vadd.f32 %v933, %v1513
        %v1515 = vpop.f32.mrb[0].mxu0
        %1516 = vmatprep.mubr.f32.mxu0 0.0
        %1517 = vmatmul.mubr.f32.gmra.mrb[0].mxu0 %v1162
        %v1518 = vpop.f32.mrb[0].mxu0
        %v1519 = vadd.f32 %v938, %v1518
        %v1520 = vpop.f32.mrb[0].mxu0
        %1521 = vmatprep.mubr.f32.mxu0 0.0
        %1522 = vmatmul.mubr.f32.gmra.mrb[0].mxu0 %v1165
        %v1523 = vpop.f32.mrb[0].mxu0
        %v1524 = vadd.f32 %v943, %v1523
        %v1525 = vpop.f32.mrb[0].mxu0
        %1526 = vmatprep.mubr.f32.mxu0 0.0
        %1527 = vmatmul.mubr.f32.gmra.mrb[0].mxu0 %v1168
        %v1528 = vpop.f32.mrb[0].mxu0
        %v1529 = vadd.f32 %v948, %v1528
        %v1530 = vpop.f32.mrb[0].mxu0
        %1531 = vmatprep.mubr.f32.mxu0 0.0
        %1532 = vmatmul.mubr.f32.gmra.mrb[0].mxu0 %v1171
        %v1533 = vpop.f32.mrb[0].mxu0
        %v1534 = vadd.f32 %v953, %v1533
        %v1535 = vpop.f32.mrb[0].mxu0
        %1536 = vmatprep.mubr.f32.mxu0 0.0
        %1537 = vmatmul.mubr.f32.gmra.mrb[0].mxu0 %v1174
        %v1538 = vpop.f32.mrb[0].mxu0
        %v1539 = vadd.f32 %v958, %v1538
        %v1540 = vpop.f32.mrb[0].mxu0
        %1541 = vmatprep.mubr.f32.mxu0 0.0
        %1542 = vmatmul.mubr.f32.gmra.mrb[0].mxu0 %v1177
        %v1543 = vpop.f32.mrb[0].mxu0
        %v1544 = vadd.f32 %v963, %v1543
        %v1545 = vpop.f32.mrb[0].mxu0
        %1546 = vmatprep.mubr.f32.mxu0 0.0
        %1547 = vmatmul.mubr.f32.gmra.mrb[0].mxu0 %v1180
        %v1548 = vpop.f32.mrb[0].mxu0
        %v1549 = vadd.f32 %v968, %v1548
        %v1550 = vpop.f32.mrb[0].mxu0
        %1551 = vmatprep.mubr.f32.mxu0 0.0
        %1552 = vmatmul.mubr.f32.gmra.mrb[0].mxu0 %v1183
        %v1553 = vpop.f32.mrb[0].mxu0
        %v1554 = vadd.f32 %v973, %v1553
        %v1555 = vpop.f32.mrb[0].mxu0
        %1556 = vmatprep.mubr.f32.mxu0 0.0
        %1557 = vmatmul.mubr.f32.gmra.mrb[0].mxu0 %v1186
        %v1558 = vpop.f32.mrb[0].mxu0
        %v1559 = vadd.f32 %v978, %v1558
        %v1560 = vpop.f32.mrb[0].mxu0
        %1561 = vmatprep.mubr.f32.mxu0 0.0
        %1562 = vmatmul.mubr.f32.gmra.mrb[0].mxu0 %v1189
        %v1563 = vpop.f32.mrb[0].mxu0
        %v1564 = vadd.f32 %v983, %v1563
        %v1565 = vpop.f32.mrb[0].mxu0
        %1566 = vmatprep.mubr.f32.mxu0 0.0
        %1567 = vmatmul.mubr.f32.gmra.mrb[0].mxu0 %v1192
        %v1568 = vpop.f32.mrb[0].mxu0
        %v1569 = vadd.f32 %v988, %v1568
        %v1570 = vpop.f32.mrb[0].mxu0
        %1571 = vmatprep.mubr.f32.mxu0 0.0
        %1572 = vmatmul.mubr.f32.gmra.mrb[0].mxu0 %v1195
        %v1573 = vpop.f32.mrb[0].mxu0
        %v1574 = vadd.f32 %v993, %v1573
        %v1575 = vpop.f32.mrb[0].mxu0
        %1576 = vmatprep.mubr.f32.mxu0 0.0
        %1577 = vmatmul.mubr.f32.gmra.mrb[0].mxu0 %v1198
        %v1578 = vpop.f32.mrb[0].mxu0
        %v1579 = vadd.f32 %v998, %v1578
        %v1580 = vpop.f32.mrb[0].mxu0
        %1581 = vmatprep.mubr.f32.mxu0 0.0
        %1582 = vmatmul.mubr.f32.gmra.mrb[0].mxu0 %v1201
        %v1583 = vpop.f32.mrb[0].mxu0
        %v1584 = vadd.f32 %v1003, %v1583
        %v1585 = vpop.f32.mrb[0].mxu0
        %1586 = vmatprep.mubr.f32.mxu0 0.0
        %1587 = vmatmul.mubr.f32.gmra.mrb[0].mxu0 %v1204
        %v1588 = vpop.f32.mrb[0].mxu0
        %v1589 = vadd.f32 %v1008, %v1588
        %v1590 = vpop.f32.mrb[0].mxu0
        %1591 = vmatprep.mubr.f32.mxu0 0.0
        %1592 = vmatmul.mubr.f32.gmra.mrb[0].mxu0 %v1207
        %v1593 = vpop.f32.mrb[0].mxu0
        %v1594 = vadd.f32 %v1013, %v1593
        %v1595 = vpop.f32.mrb[0].mxu0
        %1596 = vdwg.mxu0
        %v1597 = vld [vmem:[%s4] sm:$0x1]
        %v1599 = vlaneseq
        %v1600 = vshrl.u32 %v1599, 7
        %v1601 = vsub.s32 0, %v1600
        %v1602 = vrot.slane %v1597, %v1601
        %v1604 = vadd.f32 %v1279, %v1602
        %v1605 = vadd.f32 %v1284, %v1602
        %v1606 = vadd.f32 %v1289, %v1602
        %v1607 = vadd.f32 %v1294, %v1602
        %v1608 = vadd.f32 %v1299, %v1602
        %v1609 = vadd.f32 %v1304, %v1602
        %v1610 = vadd.f32 %v1309, %v1602
        %v1611 = vadd.f32 %v1314, %v1602
        %v1612 = vadd.f32 %v1319, %v1602
        %v1613 = vadd.f32 %v1324, %v1602
        %v1614 = vadd.f32 %v1329, %v1602
        %v1615 = vadd.f32 %v1334, %v1602
        %v1616 = vadd.f32 %v1339, %v1602
        %v1617 = vadd.f32 %v1344, %v1602
        %v1618 = vadd.f32 %v1349, %v1602
        %v1619 = vadd.f32 %v1354, %v1602
        %v1620 = vadd.f32 %v1359, %v1602
        %v1621 = vadd.f32 %v1364, %v1602
        %v1622 = vadd.f32 %v1369, %v1602
        %v1623 = vadd.f32 %v1374, %v1602
        %v1624 = vadd.f32 %v1379, %v1602
        %v1625 = vadd.f32 %v1384, %v1602
        %v1626 = vadd.f32 %v1389, %v1602
        %v1627 = vadd.f32 %v1394, %v1602
        %v1628 = vadd.f32 %v1399, %v1602
        %v1629 = vadd.f32 %v1404, %v1602
        %v1630 = vadd.f32 %v1409, %v1602
        %v1631 = vadd.f32 %v1414, %v1602
        %v1632 = vadd.f32 %v1419, %v1602
        %v1633 = vadd.f32 %v1424, %v1602
        %v1634 = vadd.f32 %v1429, %v1602
        %v1635 = vadd.f32 %v1434, %v1602
        %v1636 = vadd.f32 %v1439, %v1602
        %v1637 = vadd.f32 %v1444, %v1602
        %v1638 = vadd.f32 %v1449, %v1602
        %v1639 = vadd.f32 %v1454, %v1602
        %v1640 = vadd.f32 %v1459, %v1602
        %v1641 = vadd.f32 %v1464, %v1602
        %v1642 = vadd.f32 %v1469, %v1602
        %v1643 = vadd.f32 %v1474, %v1602
        %v1644 = vadd.f32 %v1479, %v1602
        %v1645 = vadd.f32 %v1484, %v1602
        %v1646 = vadd.f32 %v1489, %v1602
        %v1647 = vadd.f32 %v1494, %v1602
        %v1648 = vadd.f32 %v1499, %v1602
        %v1649 = vadd.f32 %v1504, %v1602
        %v1650 = vadd.f32 %v1509, %v1602
        %v1651 = vadd.f32 %v1514, %v1602
        %v1652 = vadd.f32 %v1519, %v1602
        %v1653 = vadd.f32 %v1524, %v1602
        %v1654 = vadd.f32 %v1529, %v1602
        %v1655 = vadd.f32 %v1534, %v1602
        %v1656 = vadd.f32 %v1539, %v1602
        %v1657 = vadd.f32 %v1544, %v1602
        %v1658 = vadd.f32 %v1549, %v1602
        %v1659 = vadd.f32 %v1554, %v1602
        %v1660 = vadd.f32 %v1559, %v1602
        %v1661 = vadd.f32 %v1564, %v1602
        %v1662 = vadd.f32 %v1569, %v1602
        %v1663 = vadd.f32 %v1574, %v1602
        %v1664 = vadd.f32 %v1579, %v1602
        %v1665 = vadd.f32 %v1584, %v1602
        %v1666 = vadd.f32 %v1589, %v1602
        %v1667 = vadd.f32 %v1594, %v1602
        %v1668 = vtanh.pop %v1604
        %v1669 = vtanh.pop %v1605
        %v1670 = vtanh.pop %v1606
        %v1671 = vtanh.pop %v1607
        %v1672 = vtanh.pop %v1608
        %v1673 = vtanh.pop %v1609
        %v1674 = vtanh.pop %v1610
        %v1675 = vtanh.pop %v1611
        %v1676 = vtanh.pop %v1612
        %v1677 = vtanh.pop %v1613
        %v1678 = vtanh.pop %v1614
        %v1679 = vtanh.pop %v1615
        %v1680 = vtanh.pop %v1616
        %v1681 = vtanh.pop %v1617
        %v1682 = vtanh.pop %v1618
        %v1683 = vtanh.pop %v1619
        %v1684 = vtanh.pop %v1620
        %v1685 = vtanh.pop %v1621
        %v1686 = vtanh.pop %v1622
        %v1687 = vtanh.pop %v1623
        %v1688 = vtanh.pop %v1624
        %v1689 = vtanh.pop %v1625
        %v1690 = vtanh.pop %v1626
        %v1691 = vtanh.pop %v1627
        %v1692 = vtanh.pop %v1628
        %v1693 = vtanh.pop %v1629
        %v1694 = vtanh.pop %v1630
        %v1695 = vtanh.pop %v1631
        %v1696 = vtanh.pop %v1632
        %v1697 = vtanh.pop %v1633
        %v1698 = vtanh.pop %v1634
        %v1699 = vtanh.pop %v1635
        %v1700 = vtanh.pop %v1636
        %v1701 = vtanh.pop %v1637
        %v1702 = vtanh.pop %v1638
        %v1703 = vtanh.pop %v1639
        %v1704 = vtanh.pop %v1640
        %v1705 = vtanh.pop %v1641
        %v1706 = vtanh.pop %v1642
        %v1707 = vtanh.pop %v1643
        %v1708 = vtanh.pop %v1644
        %v1709 = vtanh.pop %v1645
        %v1710 = vtanh.pop %v1646
        %v1711 = vtanh.pop %v1647
        %v1712 = vtanh.pop %v1648
        %v1713 = vtanh.pop %v1649
        %v1714 = vtanh.pop %v1650
        %v1715 = vtanh.pop %v1651
        %v1716 = vtanh.pop %v1652
        %v1717 = vtanh.pop %v1653
        %v1718 = vtanh.pop %v1654
        %v1719 = vtanh.pop %v1655
        %v1720 = vtanh.pop %v1656
        %v1721 = vtanh.pop %v1657
        %v1722 = vtanh.pop %v1658
        %v1723 = vtanh.pop %v1659
        %v1724 = vtanh.pop %v1660
        %v1725 = vtanh.pop %v1661
        %v1726 = vtanh.pop %v1662
        %v1727 = vtanh.pop %v1663
        %v1728 = vtanh.pop %v1664
        %v1729 = vtanh.pop %v1665
        %v1730 = vtanh.pop %v1666
        %v1731 = vtanh.pop %v1667
        %v1732 = vld [vmem:[%s5] sm:$0x1]
        %s1733 = sld [smem:[#allocation2]]
        %v1734 = vstv %s1733
        %vm1735 = vcmask 261120
        %v1737 = vsel %vm1735, %v1732, 0
        %v1740 = vsel %vm1735, %v1668, 0
        %v1743 = vsel %vm1735, %v1669, 0
        %v1746 = vsel %vm1735, %v1670, 0
        %v1749 = vsel %vm1735, %v1671, 0
        %v1752 = vsel %vm1735, %v1672, 0
        %v1755 = vsel %vm1735, %v1673, 0
        %v1758 = vsel %vm1735, %v1674, 0
        %v1761 = vsel %vm1735, %v1675, 0
        %v1764 = vsel %vm1735, %v1676, 0
        %v1767 = vsel %vm1735, %v1677, 0
        %v1770 = vsel %vm1735, %v1678, 0
        %v1773 = vsel %vm1735, %v1679, 0
        %v1776 = vsel %vm1735, %v1680, 0
        %v1779 = vsel %vm1735, %v1681, 0
        %v1782 = vsel %vm1735, %v1682, 0
        %v1785 = vsel %vm1735, %v1683, 0
        %v1788 = vsel %vm1735, %v1684, 0
        %v1791 = vsel %vm1735, %v1685, 0
        %v1794 = vsel %vm1735, %v1686, 0
        %v1797 = vsel %vm1735, %v1687, 0
        %v1800 = vsel %vm1735, %v1688, 0
        %v1803 = vsel %vm1735, %v1689, 0
        %v1806 = vsel %vm1735, %v1690, 0
        %v1809 = vsel %vm1735, %v1691, 0
        %v1812 = vsel %vm1735, %v1692, 0
        %v1815 = vsel %vm1735, %v1693, 0
        %v1818 = vsel %vm1735, %v1694, 0
        %v1821 = vsel %vm1735, %v1695, 0
        %v1824 = vsel %vm1735, %v1696, 0
        %v1827 = vsel %vm1735, %v1697, 0
        %v1830 = vsel %vm1735, %v1698, 0
        %v1833 = vsel %vm1735, %v1699, 0
        %v1836 = vsel %vm1735, %v1700, 0
        %v1839 = vsel %vm1735, %v1701, 0
        %v1842 = vsel %vm1735, %v1702, 0
        %v1845 = vsel %vm1735, %v1703, 0
        %v1848 = vsel %vm1735, %v1704, 0
        %v1851 = vsel %vm1735, %v1705, 0
        %v1854 = vsel %vm1735, %v1706, 0
        %v1857 = vsel %vm1735, %v1707, 0
        %v1860 = vsel %vm1735, %v1708, 0
        %v1863 = vsel %vm1735, %v1709, 0
        %v1866 = vsel %vm1735, %v1710, 0
        %v1869 = vsel %vm1735, %v1711, 0
        %v1872 = vsel %vm1735, %v1712, 0
        %v1875 = vsel %vm1735, %v1713, 0
        %v1878 = vsel %vm1735, %v1714, 0
        %v1881 = vsel %vm1735, %v1715, 0
        %v1884 = vsel %vm1735, %v1716, 0
        %v1887 = vsel %vm1735, %v1717, 0
        %v1890 = vsel %vm1735, %v1718, 0
        %v1893 = vsel %vm1735, %v1719, 0
        %v1896 = vsel %vm1735, %v1720, 0
        %v1899 = vsel %vm1735, %v1721, 0
        %v1902 = vsel %vm1735, %v1722, 0
        %v1905 = vsel %vm1735, %v1723, 0
        %v1908 = vsel %vm1735, %v1724, 0
        %v1911 = vsel %vm1735, %v1725, 0
        %v1914 = vsel %vm1735, %v1726, 0
        %v1917 = vsel %vm1735, %v1727, 0
        %v1920 = vsel %vm1735, %v1728, 0
        %v1923 = vsel %vm1735, %v1729, 0
        %v1926 = vsel %vm1735, %v1730, 0
        %v1929 = vsel %vm1735, %v1731, 0
        %1931 = vmatprep.subr.mxu0 0.0
        %1932 = vmatpush1.xpose.msra.mxu0 %v1740
        %1933 = vmatprep.subr.mxu0 0.0
        %1934 = vmatpush1.xpose.msra.mxu0 %v1743
        %1935 = vmatprep.subr.mxu0 0.0
        %1936 = vmatpush1.xpose.msra.mxu0 %v1746
        %1937 = vmatprep.subr.mxu0 0.0
        %1938 = vmatpush1.xpose.msra.mxu0 %v1749
        %1939 = vmatprep.subr.mxu0 0.0
        %1940 = vmatpush1.xpose.msra.mxu0 %v1752
        %1941 = vmatprep.subr.mxu0 0.0
        %1942 = vmatpush1.xpose.msra.mxu0 %v1755
        %1943 = vmatprep.subr.mxu0 0.0
        %1944 = vmatpush1.xpose.msra.mxu0 %v1758
        %1945 = vmatprep.subr.mxu0 0.0
        %1946 = vmatpush1.xpose.msra.mxu0 %v1761
        %1947 = vmatprep.subr.mxu0 0.0
        %1948 = vmatpush1.xpose.msra.mxu0 %v1764
        %1949 = vmatprep.subr.mxu0 0.0
        %1950 = vmatpush1.xpose.msra.mxu0 %v1767
        %1951 = vmatprep.subr.mxu0 0.0
        %1952 = vmatpush1.xpose.msra.mxu0 %v1770
        %1953 = vmatprep.subr.mxu0 0.0
        %1954 = vmatpush1.xpose.msra.mxu0 %v1773
        %1955 = vmatprep.subr.mxu0 0.0
        %1956 = vmatpush1.xpose.msra.mxu0 %v1776
        %1957 = vmatprep.subr.mxu0 0.0
        %1958 = vmatpush1.xpose.msra.mxu0 %v1779
        %1959 = vmatprep.subr.mxu0 0.0
        %1960 = vmatpush1.xpose.msra.mxu0 %v1782
        %1961 = vmatprep.subr.mxu0 0.0
        %1962 = vmatpush1.xpose.msra.mxu0 %v1785
        %1963 = vmatprep.subr.mxu0 0.0
        %1964 = vmatpush1.xpose.msra.mxu0 %v1788
        %1965 = vmatprep.subr.mxu0 0.0
        %1966 = vmatpush1.xpose.msra.mxu0 %v1791
        %1967 = vmatprep.subr.mxu0 0.0
        %1968 = vmatpush1.xpose.msra.mxu0 %v1794
        %1969 = vmatprep.subr.mxu0 0.0
        %1970 = vmatpush1.xpose.msra.mxu0 %v1797
        %1971 = vmatprep.subr.mxu0 0.0
        %1972 = vmatpush1.xpose.msra.mxu0 %v1800
        %1973 = vmatprep.subr.mxu0 0.0
        %1974 = vmatpush1.xpose.msra.mxu0 %v1803
        %1975 = vmatprep.subr.mxu0 0.0
        %1976 = vmatpush1.xpose.msra.mxu0 %v1806
        %1977 = vmatprep.subr.mxu0 0.0
        %1978 = vmatpush1.xpose.msra.mxu0 %v1809
        %1979 = vmatprep.subr.mxu0 0.0
        %1980 = vmatpush1.xpose.msra.mxu0 %v1812
        %1981 = vmatprep.subr.mxu0 0.0
        %1982 = vmatpush1.xpose.msra.mxu0 %v1815
        %1983 = vmatprep.subr.mxu0 0.0
        %1984 = vmatpush1.xpose.msra.mxu0 %v1818
        %1985 = vmatprep.subr.mxu0 0.0
        %1986 = vmatpush1.xpose.msra.mxu0 %v1821
        %1987 = vmatprep.subr.mxu0 0.0
        %1988 = vmatpush1.xpose.msra.mxu0 %v1824
        %1989 = vmatprep.subr.mxu0 0.0
        %1990 = vmatpush1.xpose.msra.mxu0 %v1827
        %1991 = vmatprep.subr.mxu0 0.0
        %1992 = vmatpush1.xpose.msra.mxu0 %v1830
        %1993 = vmatprep.subr.mxu0 0.0
        %1994 = vmatpush1.xpose.msra.mxu0 %v1833
        %1995 = vmatprep.mubr.f32.mxu0 0.0
        %1996 = vmatmul.mubr.f32.gmra.mrb[0].mxu0 %v1737
        %v1997 = vpop.f32.mrb[0].mxu0
        %v1998 = vadd.f32 %v1734, %v1997
        %v1999 = vpop.f32.mrb[0].mxu0
        %v2000 = vadd.f32 %v1734, %v1999
        %2001 = vdwg.mxu0
        %2002 = vmatprep.subr.mxu0 0.0
        %2003 = vmatpush1.xpose.msra.mxu0 %v1836
        %2004 = vmatprep.subr.mxu0 0.0
        %2005 = vmatpush1.xpose.msra.mxu0 %v1839
        %2006 = vmatprep.subr.mxu0 0.0
        %2007 = vmatpush1.xpose.msra.mxu0 %v1842
        %2008 = vmatprep.subr.mxu0 0.0
        %2009 = vmatpush1.xpose.msra.mxu0 %v1845
        %2010 = vmatprep.subr.mxu0 0.0
        %2011 = vmatpush1.xpose.msra.mxu0 %v1848
        %2012 = vmatprep.subr.mxu0 0.0
        %2013 = vmatpush1.xpose.msra.mxu0 %v1851
        %2014 = vmatprep.subr.mxu0 0.0
        %2015 = vmatpush1.xpose.msra.mxu0 %v1854
        %2016 = vmatprep.subr.mxu0 0.0
        %2017 = vmatpush1.xpose.msra.mxu0 %v1857
        %2018 = vmatprep.subr.mxu0 0.0
        %2019 = vmatpush1.xpose.msra.mxu0 %v1860
        %2020 = vmatprep.subr.mxu0 0.0
        %2021 = vmatpush1.xpose.msra.mxu0 %v1863
        %2022 = vmatprep.subr.mxu0 0.0
        %2023 = vmatpush1.xpose.msra.mxu0 %v1866
        %2024 = vmatprep.subr.mxu0 0.0
        %2025 = vmatpush1.xpose.msra.mxu0 %v1869
        %2026 = vmatprep.subr.mxu0 0.0
        %2027 = vmatpush1.xpose.msra.mxu0 %v1872
        %2028 = vmatprep.subr.mxu0 0.0
        %2029 = vmatpush1.xpose.msra.mxu0 %v1875
        %2030 = vmatprep.subr.mxu0 0.0
        %2031 = vmatpush1.xpose.msra.mxu0 %v1878
        %2032 = vmatprep.subr.mxu0 0.0
        %2033 = vmatpush1.xpose.msra.mxu0 %v1881
        %2034 = vmatprep.subr.mxu0 0.0
        %2035 = vmatpush1.xpose.msra.mxu0 %v1884
        %2036 = vmatprep.subr.mxu0 0.0
        %2037 = vmatpush1.xpose.msra.mxu0 %v1887
        %2038 = vmatprep.subr.mxu0 0.0
        %2039 = vmatpush1.xpose.msra.mxu0 %v1890
        %2040 = vmatprep.subr.mxu0 0.0
        %2041 = vmatpush1.xpose.msra.mxu0 %v1893
        %2042 = vmatprep.subr.mxu0 0.0
        %2043 = vmatpush1.xpose.msra.mxu0 %v1896
        %2044 = vmatprep.subr.mxu0 0.0
        %2045 = vmatpush1.xpose.msra.mxu0 %v1899
        %2046 = vmatprep.subr.mxu0 0.0
        %2047 = vmatpush1.xpose.msra.mxu0 %v1902
        %2048 = vmatprep.subr.mxu0 0.0
        %2049 = vmatpush1.xpose.msra.mxu0 %v1905
        %2050 = vmatprep.subr.mxu0 0.0
        %2051 = vmatpush1.xpose.msra.mxu0 %v1908
        %2052 = vmatprep.subr.mxu0 0.0
        %2053 = vmatpush1.xpose.msra.mxu0 %v1911
        %2054 = vmatprep.subr.mxu0 0.0
        %2055 = vmatpush1.xpose.msra.mxu0 %v1914
        %2056 = vmatprep.subr.mxu0 0.0
        %2057 = vmatpush1.xpose.msra.mxu0 %v1917
        %2058 = vmatprep.subr.mxu0 0.0
        %2059 = vmatpush1.xpose.msra.mxu0 %v1920
        %2060 = vmatprep.subr.mxu0 0.0
        %2061 = vmatpush1.xpose.msra.mxu0 %v1923
        %2062 = vmatprep.subr.mxu0 0.0
        %2063 = vmatpush1.xpose.msra.mxu0 %v1926
        %2064 = vmatprep.subr.mxu0 0.0
        %2065 = vmatpush1.xpose.msra.mxu0 %v1929
        %2066 = vmatprep.mubr.f32.mxu0 0.0
        %2067 = vmatmul.mubr.f32.gmra.mrb[0].mxu0 %v1737
        %v2068 = vpop.f32.mrb[0].mxu0
        %v2069 = vadd.f32 %v1734, %v2068
        %v2070 = vpop.f32.mrb[0].mxu0
        %v2071 = vadd.f32 %v1734, %v2070
        %2072 = vdwg.mxu0
        %v2073 = vxor.u32 %v1998, 2147483648
        %v2074 = vxor.u32 %v2000, 2147483648
        %v2075 = vxor.u32 %v2069, 2147483648
        %v2076 = vxor.u32 %v2071, 2147483648
        %v2077 = vmul.f32 %v2073, 1.442695
        %v2078 = vpow.pop %v2077
        %v2079 = vmul.f32 %v2074, 1.442695
        %v2080 = vpow.pop %v2079
        %v2081 = vmul.f32 %v2075, 1.442695
        %v2082 = vpow.pop %v2081
        %v2083 = vmul.f32 %v2076, 1.442695
        %v2084 = vpow.pop %v2083
        %v2085 = vadd.f32 %v2078, 1.0
        %v2086 = vadd.f32 %v2080, 1.0
        %v2087 = vadd.f32 %v2082, 1.0
        %v2088 = vadd.f32 %v2084, 1.0
        %v2089 = vrcp.pop %v2085
        %v2090 = vmul.f32 1.0, %v2089
        %v2091 = vrcp.pop %v2086
        %v2092 = vmul.f32 1.0, %v2091
        %v2093 = vrcp.pop %v2087
        %v2094 = vmul.f32 1.0, %v2093
        %v2095 = vrcp.pop %v2088
        %v2096 = vmul.f32 1.0, %v2095
        %v2101 = vcombine.low %v2090, %v2092
        %v2102 = vcombine.low %v2094, %v2096
        %v2104 = vunpack.c.l.s4 1966171168
        %v2105 = vunpack.c.0.s8 %v2104
        %v2106 = vlaneseq
        %v2107 = vshrl.u32 %v2106, 7
        %v2108 = vsub.s32 %v2105, %v2107
        %v2109 = vrot.slane %v2101, %v2108
        %v2111 = vunpack.c.l.s4 1966171168
        %v2112 = vunpack.c.0.s8 %v2111
        %v2113 = vlaneseq
        %v2114 = vshrl.u32 %v2113, 7
        %v2115 = vsub.s32 %v2112, %v2114
        %v2116 = vrot.slane %v2102, %v2115
        %v2117 = vcombine.low %v2109, %v2116
        %v2119 = vunpack.c.l.s4 1966171168
        %v2120 = vunpack.c.0.s8 %v2119
        %v2121 = vlaneseq
        %v2122 = vshrl.u32 %v2121, 7
        %v2123 = vsub.s32 %v2120, %v2122
        %v2124 = vrot.slane %v2117, %v2123
        %v2126 = vlaneseq
        %vm2127 = vcmp.ge.s32.totalorder %v2126, 0
        %vm2128 = vcmp.lt.s32.totalorder %v2126, 512
        %vm2129 = vmand %vm2127, %vm2128
        %2130 = vst.msk [vmem:[%s289] sm:$0xf] %vm2129, %v2124
        %s2131 = sand.u32 %s187, 1
        %s2132 = scalar_lea.sflag [#allocation4], %s2131
        %s2133 = sand.u32 %s187, 1
        %s2134 = smul.addr %s2133, 4
        %s2135 = scalar_lea.vmem [#allocation3], %s2134
        // Predicated region
        $region49: #{tpu_custom_call.1} parent=47 // pred_check
          %p2136 = pneg %p197
        $region50: #{tpu_custom_call.1} parent=47 // pred_check_branch
          %2138 = sbr.rel (%p2136) target = $region52
        $region51: #{tpu_custom_call.1} parent=47 // pred_region
          %s2139 = smul.u32 4, %s22
          %s2141 = ssub.s32 64, 64
          %2142 = vsyncadd %s2132, %s2141
          %s2143 = smul.addr %s2139, 16
          %s2144 = scalar_lea.hbm %s7, %s2143
          %s2146 = sshll.u32 %s2135, 4
          %s2147 = int_to_ptr.vmem [resolvable:$true] %s2146
          %2149 = dma.vmem_to_hbm [thread:$0]  %s2147, 64, %s2144, %s2132
        $region52: #{tpu_custom_call.1} parent=47 // pred_fallthru
          _
      $region48: #{tpu_custom_call.1} parent=5 // pred_fallthru
        _
      %p2150 = scmp.le.s32.totalorder 2, %s17
      // Predicated region
      $region53: #{tpu_custom_call.1} parent=5 // pred_check
        %p2151 = pneg %p2150
      $region54: #{tpu_custom_call.1} parent=5 // pred_check_branch
        %2153 = sbr.rel (%p2151) target = $region56
      $region55: #{tpu_custom_call.1} parent=5 // pred_region
        %s2154 = ssub.s32 %s17, 2
        // Predicated region
        $region57: #{tpu_custom_call.1} parent=55 // pred_check
          %p2155 = pneg %p203
        $region58: #{tpu_custom_call.1} parent=55 // pred_check_branch
          %2157 = sbr.rel (%p2155) target = $region60
        $region59: #{tpu_custom_call.1} parent=55 // pred_region
          %s2158 = sand.u32 %s188, 1
          %s2159 = scalar_lea.sflag [#allocation4], %s2158
          %s2160 = sand.u32 %s188, 1
          %s2161 = smul.addr %s2160, 4
          %s2162 = scalar_lea.vmem [#allocation3], %s2161
          %2163 = dma.done %s2159, 64
        $region60: #{tpu_custom_call.1} parent=55 // pred_fallthru
          _
      $region56: #{tpu_custom_call.1} parent=5 // pred_fallthru
        _
    $region6: #{tpu_custom_call.1} parent=1 // loop_footer
      %s21 = sadd.s32 1, %s17
    $region7: #{tpu_custom_call.1} parent=1 // loop_footer_branch
      %16 = sbr.rel target = $region3
    $region8: #{tpu_custom_call.1} parent=1 // loop_exit
      _
    %2164 = vsyncpa [#allocation4], 1
    %s2165 = scalar_lea.sflag [#allocation4], 1
    %2166 = vsyncpa %s2165, 1

</llo_original>
